<compile_context>
chip_gen: v7x
topology: tpu7x:2x2x1
jax: 0.10.0
libtpu: 0.0.40
codegen_flags: <defaults>
</compile_context>

<pallas_src>
import jax
import jax.numpy as jnp
from jax.experimental import pallas as pl
from jax.experimental.pallas import tpu as pltpu


# ----------------------------- in-kernel helpers -----------------------------

def _pad_time(h, pad):
    """Zero-pad the time (second) axis by `pad` on both sides."""
    if pad == 0:
        return h
    B, _, C = h.shape
    z = jnp.zeros((B, pad, C), h.dtype)
    return jnp.concatenate([z, h, z], axis=1)


def _conv1d_same(h, w, b, T):
    """1-D conv over time, stride 1, zero 'same' padding.

    h: (1, T, Cin) f32; w: (K, Cin, Cout) matmul dtype; b: (1, Cout) f32.
    """
    K, Cin, Cout = w.shape
    # TODO(synk): assumes odd kernel_size (PyTorch padding=(K-1)//2 convention).
    pad = (K - 1) // 2
    hp = _pad_time(h, pad)                                   # (1, T+K-1, Cin)

    def tap(k):
        xs = hp[:, k:k + T, :].reshape(T, Cin).astype(w.dtype)
        return jnp.dot(xs, w[k], preferred_element_type=jnp.float32)

    acc = tap(pad) + b                                       # init with center tap + bias
    for k in range(K):
        if k != pad:
            acc = acc + tap(k)
    return acc.reshape(1, T, Cout)


def _conv1d_same_grouped(h, w, b, T):
    """Grouped conv: each of G chunks keeps its own (F -> F) filters.

    h: (1, T, G*F) f32; w: (G, K, F, F) matmul dtype; b: (1, G*F) f32.
    One shared zero-padded activation feeds all groups / taps.
    """
    G, K, F, _ = w.shape
    pad = (K - 1) // 2
    hp = _pad_time(h, pad)                                   # (1, T+K-1, G*F)
    outs = []
    for g in range(G):
        hg = hp[:, :, g * F:(g + 1) * F]

        def tap(k, hg=hg, g=g):
            xs = hg[:, k:k + T, :].reshape(T, F).astype(w.dtype)
            return jnp.dot(xs, w[g, k], preferred_element_type=jnp.float32)

        acc = tap(pad) + b[:, g * F:(g + 1) * F]
        for k in range(K):
            if k != pad:
                acc = acc + tap(k)
        outs.append(acc)
    return jnp.concatenate(outs, axis=-1).reshape(1, T, G * F)


def _ln_chunks(h, gamma, beta, F, eps=1e-5):
    """LayerNorm applied independently to each F-wide chunk of the last axis.

    h: (1, T, n*F) f32; gamma/beta: (1, n*F) f32.  Single-pass statistics.
    """
    n = h.shape[-1] // F
    parts = []
    for j in range(n):
        c = h[:, :, j * F:(j + 1) * F]
        mu = jnp.mean(c, axis=-1, keepdims=True)
        ms = jnp.mean(c * c, axis=-1, keepdims=True)
        var = ms - mu * mu
        parts.append((c - mu) * jax.lax.rsqrt(var + eps))
    hn = jnp.concatenate(parts, axis=-1)
    return hn * gamma[None, :, :] + beta[None, :, :]


# --------------------------------- the kernel --------------------------------

def _variance_adaptor_kernel(
        ctrl_ref, lb_ref,                                    # SMEM scalars
        x_ref, keep_ref,
        w1_ref, b1_ref, g1_ref, be1_ref,                     # fused conv block 1
        w2_ref, b2_ref, g2_ref, be2_ref,                     # grouped conv block 2
        lw_ref, pbins_ref, ebins_ref, tab_ref,
        out_ref, scal_ref):
    x = x_ref[...]                                           # (1, T, D) f32
    keep = keep_ref[...]                                     # (1, T, 1) f32, 1 = valid
    _, T, D = x.shape
    b1 = b1_ref[...]
    F = b1.shape[1] // 3                                     # n_conv_filter

    # masked input, computed once and shared by all three predictors
    xm = x * keep

    # conv block 1 (fused on the Cout axis across the 3 predictors) + ReLU + LN
    h = _conv1d_same(xm, w1_ref[...], b1, T)                 # (1, T, 3F)
    h = jnp.maximum(h, 0.0)
    h = _ln_chunks(h, g1_ref[...], be1_ref[...], F)
    # re-mask between conv blocks (same behavior as the previous implementation).
    h = h * keep

    # conv block 2 (each predictor keeps its own F->F filters) + ReLU + LN
    h = _conv1d_same_grouped(h, w2_ref[...], b2_ref[...], T)
    h = jnp.maximum(h, 0.0)
    h = _ln_chunks(h, g2_ref[...], be2_ref[...], F)

    # (F, 1) linear heads: VPU multiply + per-chunk lane reduction (no MXU)
    prod = h * lw_ref[...][None, :, :]                       # (1, T, 3F)
    keep_t = keep[:, :, 0]                                   # (1, T)
    log_dur = (jnp.sum(prod[:, :, 0:F], axis=-1) + lb_ref[0]) * keep_t
    pitch = (jnp.sum(prod[:, :, F:2 * F], axis=-1) + lb_ref[1]) * keep_t * ctrl_ref[0]
    energy = (jnp.sum(prod[:, :, 2 * F:3 * F], axis=-1) + lb_ref[2]) * keep_t * ctrl_ref[1]

    # duration: round(exp(log_d) - 1).clamp(min=0) * d_control
    dur = jnp.maximum(jnp.round(jnp.exp(log_dur) - 1.0), 0.0) * ctrl_ref[2]

    # bucketize + fused pitch/energy embedding lookup: one two-hot MXU matmul
    pbins = pbins_ref[...]                                   # (1, n_pitch_bin - 1)
    ebins = ebins_ref[...]                                   # (1, n_energy_bin - 1)
    nbp = pbins.shape[1] + 1
    nbe = ebins.shape[1] + 1
    pidx = jnp.sum((pitch[:, :, None] > pbins[None, :, :]).astype(jnp.int32), axis=-1)
    eidx = jnp.sum((energy[:, :, None] > ebins[None, :, :]).astype(jnp.int32), axis=-1)
    lane = jax.lax.broadcasted_iota(jnp.int32, (T, nbp + nbe), 1)
    twohot = ((lane == pidx.reshape(T, 1)) |
              (lane == (eidx.reshape(T, 1) + nbp))).astype(jnp.float32)
    emb_sum = jnp.dot(twohot, tab_ref[...],
                      preferred_element_type=jnp.float32)    # pitch_emb + energy_emb

    out_ref[...] = x + emb_sum.reshape(1, T, D)
    scal_ref[...] = jnp.concatenate(
        [log_dur[:, None, :], pitch[:, None, :], energy[:, None, :], dur[:, None, :]],
        axis=1)                                              # (1, 4, T), lane-dense on T


# --------------------------------- JAX glue -----------------------------------

def _length_regulator(x, durations, max_mel_len):
    """Expand each phoneme frame by its (integer) duration, pad to max_mel_len."""
    # TODO(synk): PyTorch's LengthRegulator returns a data-dependent output
    # length; here the output is padded to a static max_mel_len instead.
    d = durations.astype(jnp.int32)
    cum = jnp.cumsum(d, axis=1)                              # (B, T)
    mel_len = cum[:, -1]                                     # (B,)
    frames = jnp.arange(max_mel_len)
    src = jnp.sum((cum[:, None, :] <= frames[None, :, None]).astype(jnp.int32),
                  axis=-1)
    src = jnp.minimum(src, x.shape[1] - 1)
    out = jnp.take_along_axis(x, src[:, :, None], axis=1)
    valid = (frames[None, :] < mel_len[:, None]).astype(x.dtype)
    return out * valid[:, :, None], mel_len


def variance_adaptor(x, x_mask, packed, *, p_control=1.0, e_control=1.0,
                     d_control=1.0, max_mel_len=32):
    """Inference-path VarianceAdaptor.forward (duration/pitch/energy targets = None)."""
    B, T, D = x.shape
    x = x.astype(jnp.float32)
    keep = jnp.logical_not(x_mask).astype(jnp.float32)[:, :, None]   # (B, T, 1)
    ctrl = jnp.asarray([p_control, e_control, d_control], jnp.float32)

    weights = [packed[k] for k in ("w1", "b1", "g1", "be1", "w2", "b2", "g2",
                                   "be2", "lw", "pbins", "ebins", "table")]

    def _const_spec(a):
        nd = a.ndim
        return pl.BlockSpec(a.shape, lambda b: (0,) * nd)    # VMEM-resident weights

    smem_spec = pl.BlockSpec(memory_space=pltpu.MemorySpace.SMEM)
    in_specs = ([smem_spec, smem_spec,
                 pl.BlockSpec((1, T, D), lambda b: (b, 0, 0)),
                 pl.BlockSpec((1, T, 1), lambda b: (b, 0, 0))]
                + [_const_spec(a) for a in weights])
    out_specs = (pl.BlockSpec((1, T, D), lambda b: (b, 0, 0)),
                 pl.BlockSpec((1, 4, T), lambda b: (b, 0, 0)))
    out_shape = (jax.ShapeDtypeStruct((B, T, D), jnp.float32),   # x + pitch_emb + energy_emb
                 jax.ShapeDtypeStruct((B, 4, T), jnp.float32))   # [log_dur, pitch, energy, dur]

    fused, scal = pl.pallas_call(
        _variance_adaptor_kernel,
        grid=(B,),
        in_specs=in_specs,
        out_specs=out_specs,
        out_shape=out_shape,
        compiler_params=pltpu.CompilerParams(
            dimension_semantics=("parallel",),
            vmem_limit_bytes=56 * 1024 * 1024),
    )(ctrl, packed["lb"], x, keep, *weights)

    log_dur = scal[:, 0, :]
    pitch = scal[:, 1, :]
    energy = scal[:, 2, :]
    dur = scal[:, 3, :]
    output, mel_len = _length_regulator(fused, dur, max_mel_len)
    return output, mel_len, pitch, energy, log_dur


# ----------------------------- parameter building ------------------------------

def init_variance_predictor(key, input_dim, n_filter, kernel_size):
    """VariancePredictor params: Conv1d, LayerNorm, Conv1d, LayerNorm, Linear(F, 1)."""
    k1, k2, k3 = jax.random.split(key, 3)
    w1 = jax.random.normal(k1, (kernel_size, input_dim, n_filter), jnp.float32) * 0.1
    b1 = jnp.zeros((1, n_filter), jnp.float32)
    g1 = jnp.ones((1, n_filter), jnp.float32)
    be1 = jnp.zeros((1, n_filter), jnp.float32)
    w2 = jax.random.normal(k2, (kernel_size, n_filter, n_filter), jnp.float32) * 0.1
    b2 = jnp.zeros((1, n_filter), jnp.float32)
    g2 = jnp.ones((1, n_filter), jnp.float32)
    be2 = jnp.zeros((1, n_filter), jnp.float32)
    lw = jax.random.normal(k3, (n_filter, 1), jnp.float32) * 0.1
    lb = jnp.zeros((1, 1), jnp.float32)
    return [w1, b1, g1, be1, w2, b2, g2, be2, lw, lb]


def pack_variance_adaptor_params(dur_p, pitch_p, energy_p,
                                 pitch_bins, pitch_table, energy_bins, energy_table,
                                 matmul_dtype=jnp.bfloat16):
    """Fuse the three predictors' parameters for the single Pallas kernel."""
    preds = (dur_p, pitch_p, energy_p)
    return {
        "w1": jnp.concatenate([p[0] for p in preds], axis=2).astype(matmul_dtype),  # (K, D, 3F)
        "b1": jnp.concatenate([p[1] for p in preds], axis=1),                       # (1, 3F)
        "g1": jnp.concatenate([p[2] for p in preds], axis=1),
        "be1": jnp.concatenate([p[3] for p in preds], axis=1),
        "w2": jnp.stack([p[4] for p in preds], axis=0).astype(matmul_dtype),        # (3, K, F, F)
        "b2": jnp.concatenate([p[5] for p in preds], axis=1),
        "g2": jnp.concatenate([p[6] for p in preds], axis=1),
        "be2": jnp.concatenate([p[7] for p in preds], axis=1),
        "lw": jnp.concatenate([p[8][:, 0] for p in preds], axis=0)[None, :],        # (1, 3F)
        "lb": jnp.stack([p[9].reshape(()) for p in preds]).astype(jnp.float32),     # (3,) SMEM
        "pbins": pitch_bins.astype(jnp.float32),
        "ebins": energy_bins.astype(jnp.float32),
        # Embedding table kept f32: the two-hot matmul is an exact row selection.
        "table": jnp.concatenate([pitch_table, energy_table], axis=0).astype(jnp.float32),
    }


if __name__ == "__main__":
    # Small, forward-consistent shapes.
    B, T, D = 2, 8, 32                 # batch, phoneme sequence length, input_dim
    n_conv_filter, conv_kernel_size = 32, 3
    n_pitch_bin, n_energy_bin = 8, 8
    pitch_min, pitch_max, pitch_mean, pitch_sigma = 80.0, 400.0, 200.0, 50.0
    energy_min, energy_max, energy_mean, energy_sigma = 0.0, 4.0, 2.0, 1.0

    key = jax.random.PRNGKey(0)
    kx, kd, kp, ke, kpe, kee = jax.random.split(key, 6)

    x = jax.random.normal(kx, (B, T, D), jnp.float32)
    lengths = jnp.array([8, 6], jnp.int32)
    x_mask = jnp.arange(T)[None, :] >= lengths[:, None]      # True == padded

    pitch_bins = jnp.linspace((pitch_min - pitch_mean) / pitch_sigma,
                              (pitch_max - pitch_mean) / pitch_sigma,
                              n_pitch_bin - 1).reshape(1, -1).astype(jnp.float32)
    energy_bins = jnp.linspace((energy_min - energy_mean) / energy_sigma,
                               (energy_max - energy_mean) / energy_sigma,
                               n_energy_bin - 1).reshape(1, -1).astype(jnp.float32)
    pitch_table = jax.random.normal(kpe, (n_pitch_bin, D), jnp.float32) * 0.1
    energy_table = jax.random.normal(kee, (n_energy_bin, D), jnp.float32) * 0.1

    packed = pack_variance_adaptor_params(
        init_variance_predictor(kd, D, n_conv_filter, conv_kernel_size),
        init_variance_predictor(kp, D, n_conv_filter, conv_kernel_size),
        init_variance_predictor(ke, D, n_conv_filter, conv_kernel_size),
        pitch_bins, pitch_table, energy_bins, energy_table)

    output, mel_len, pitch_pred, energy_pred, log_dur_pred = variance_adaptor(
        x, x_mask, packed, p_control=1.0, e_control=1.0, d_control=1.0,
        max_mel_len=4 * T)

    jax.block_until_ready((output, mel_len, pitch_pred, energy_pred, log_dur_pred))
    assert output.shape == (B, 4 * T, D)
    assert mel_len.shape == (B,)
    assert pitch_pred.shape == (B, T)
    assert energy_pred.shape == (B, T)
    assert log_dur_pred.shape == (B, T)
    assert bool(jnp.all(jnp.isfinite(output)))
    assert bool(jnp.all(jnp.isfinite(log_dur_pred)))
    print("KERNEL_OK")
</pallas_src>

<mosaic_0001>
module attributes {stable_mosaic.version = 11 : i64} {
  func.func @_variance_adaptor_kernel(%arg0: i32, %arg1: memref<3xf32, #tpu.memory_space<smem>>, %arg2: memref<3xf32, #tpu.memory_space<smem>>, %arg3: memref<1x8x32xf32, #tpu.memory_space<vmem>>, %arg4: memref<1x8x1xf32, #tpu.memory_space<vmem>>, %arg5: memref<3x32x96xbf16, #tpu.memory_space<vmem>>, %arg6: memref<1x96xf32, #tpu.memory_space<vmem>>, %arg7: memref<1x96xf32, #tpu.memory_space<vmem>>, %arg8: memref<1x96xf32, #tpu.memory_space<vmem>>, %arg9: memref<3x3x32x32xbf16, #tpu.memory_space<vmem>>, %arg10: memref<1x96xf32, #tpu.memory_space<vmem>>, %arg11: memref<1x96xf32, #tpu.memory_space<vmem>>, %arg12: memref<1x96xf32, #tpu.memory_space<vmem>>, %arg13: memref<1x96xf32, #tpu.memory_space<vmem>>, %arg14: memref<1x7xf32, #tpu.memory_space<vmem>>, %arg15: memref<1x7xf32, #tpu.memory_space<vmem>>, %arg16: memref<16x32xf32, #tpu.memory_space<vmem>>, %arg17: memref<1x8x32xf32, #tpu.memory_space<vmem>>, %arg18: memref<1x4x8xf32, #tpu.memory_space<vmem>>) attributes {dimension_semantics = [#tpu.dimension_semantics<parallel>], iteration_bounds = array<i64: 2>, scalar_prefetch = 0 : i64, scratch_operands = 0 : i64, tpu.core_type = #tpu.core_type<tc>, window_params = [{transform_indices = @transform_0, window_bounds = array<i64: 3>}, {transform_indices = @transform_1, window_bounds = array<i64: 3>}, {transform_indices = @transform_2, window_bounds = array<i64: 1, 8, 32>}, {transform_indices = @transform_3, window_bounds = array<i64: 1, 8, 1>}, {pipeline_mode = #tpu.pipeline_mode<synchronous>, transform_indices = @transform_4, window_bounds = array<i64: 3, 32, 96>}, {pipeline_mode = #tpu.pipeline_mode<synchronous>, transform_indices = @transform_5, window_bounds = array<i64: 1, 96>}, {pipeline_mode = #tpu.pipeline_mode<synchronous>, transform_indices = @transform_6, window_bounds = array<i64: 1, 96>}, {pipeline_mode = #tpu.pipeline_mode<synchronous>, transform_indices = @transform_7, window_bounds = array<i64: 1, 96>}, {pipeline_mode = #tpu.pipeline_mode<synchronous>, transform_indices = @transform_8, window_bounds = array<i64: 3, 3, 32, 32>}, {pipeline_mode = #tpu.pipeline_mode<synchronous>, transform_indices = @transform_9, window_bounds = array<i64: 1, 96>}, {pipeline_mode = #tpu.pipeline_mode<synchronous>, transform_indices = @transform_10, window_bounds = array<i64: 1, 96>}, {pipeline_mode = #tpu.pipeline_mode<synchronous>, transform_indices = @transform_11, window_bounds = array<i64: 1, 96>}, {pipeline_mode = #tpu.pipeline_mode<synchronous>, transform_indices = @transform_12, window_bounds = array<i64: 1, 96>}, {pipeline_mode = #tpu.pipeline_mode<synchronous>, transform_indices = @transform_13, window_bounds = array<i64: 1, 7>}, {pipeline_mode = #tpu.pipeline_mode<synchronous>, transform_indices = @transform_14, window_bounds = array<i64: 1, 7>}, {pipeline_mode = #tpu.pipeline_mode<synchronous>, transform_indices = @transform_15, window_bounds = array<i64: 16, 32>}, {transform_indices = @transform_16, window_bounds = array<i64: 1, 8, 32>}, {transform_indices = @transform_17, window_bounds = array<i64: 1, 4, 8>}]} {
    %c0 = arith.constant 0 : index
    %c0_0 = arith.constant 0 : index
    %c0_1 = arith.constant 0 : index
    %0 = vector.load %arg3[%c0, %c0_0, %c0_1] : memref<1x8x32xf32, #tpu.memory_space<vmem>>, vector<1x8x32xf32>
    %c0_2 = arith.constant 0 : index
    %c0_3 = arith.constant 0 : index
    %c0_4 = arith.constant 0 : index
    %1 = vector.load %arg4[%c0_2, %c0_3, %c0_4] : memref<1x8x1xf32, #tpu.memory_space<vmem>>, vector<1x8x1xf32>
    %c0_5 = arith.constant 0 : index
    %c0_6 = arith.constant 0 : index
    %2 = vector.load %arg6[%c0_5, %c0_6] : memref<1x96xf32, #tpu.memory_space<vmem>>, vector<1x96xf32>
    %3 = vector.broadcast %1 : vector<1x8x1xf32> to vector<1x8x32xf32>
    %4 = arith.mulf %0, %3 : vector<1x8x32xf32>
    %c0_7 = arith.constant 0 : index
    %c0_8 = arith.constant 0 : index
    %c0_9 = arith.constant 0 : index
    %5 = vector.load %arg5[%c0_7, %c0_8, %c0_9] : memref<3x32x96xbf16, #tpu.memory_space<vmem>>, vector<3x32x96xbf16>
    %cst = arith.constant 0.000000e+00 : f32
    %6 = vector.broadcast %cst : f32 to vector<1x1x32xf32>
    %7 = tpu.concatenate %6, %4, %6 in 1 : vector<1x1x32xf32>, vector<1x8x32xf32>, vector<1x1x32xf32> -> vector<1x10x32xf32>
    %8 = vector.extract_strided_slice %7 {offsets = [0, 1, 0], sizes = [1, 8, 32], strides = [1, 1, 1]} : vector<1x10x32xf32> to vector<1x8x32xf32>
    %9 = vector.shape_cast %8 : vector<1x8x32xf32> to vector<8x32xf32>
    %10 = arith.truncf %9 : vector<8x32xf32> to vector<8x32xbf16>
    %11 = vector.extract_strided_slice %5 {offsets = [1, 0, 0], sizes = [1, 32, 96], strides = [1, 1, 1]} : vector<3x32x96xbf16> to vector<1x32x96xbf16>
    %12 = vector.shape_cast %11 : vector<1x32x96xbf16> to vector<32x96xbf16>
    %cst_10 = arith.constant dense<0.000000e+00> : vector<8x96xf32>
    %13 = tpu.matmul %10, %12, %cst_10 {dimension_numbers = #tpu.dot_dimension_numbers<[1], [0], [0], [1], [0, 0, 1, 1], [], []>} : vector<8x32xbf16>, vector<32x96xbf16>, vector<8x96xf32> -> vector<8x96xf32>
    %14 = vector.broadcast %2 : vector<1x96xf32> to vector<8x96xf32>
    %15 = arith.addf %13, %14 : vector<8x96xf32>
    %16 = vector.extract_strided_slice %7 {offsets = [0, 0, 0], sizes = [1, 8, 32], strides = [1, 1, 1]} : vector<1x10x32xf32> to vector<1x8x32xf32>
    %17 = vector.shape_cast %16 : vector<1x8x32xf32> to vector<8x32xf32>
    %18 = arith.truncf %17 : vector<8x32xf32> to vector<8x32xbf16>
    %19 = vector.extract_strided_slice %5 {offsets = [0, 0, 0], sizes = [1, 32, 96], strides = [1, 1, 1]} : vector<3x32x96xbf16> to vector<1x32x96xbf16>
    %20 = vector.shape_cast %19 : vector<1x32x96xbf16> to vector<32x96xbf16>
    %cst_11 = arith.constant dense<0.000000e+00> : vector<8x96xf32>
    %21 = tpu.matmul %18, %20, %cst_11 {dimension_numbers = #tpu.dot_dimension_numbers<[1], [0], [0], [1], [0, 0, 1, 1], [], []>} : vector<8x32xbf16>, vector<32x96xbf16>, vector<8x96xf32> -> vector<8x96xf32>
    %22 = arith.addf %15, %21 : vector<8x96xf32>
    %23 = vector.extract_strided_slice %7 {offsets = [0, 2, 0], sizes = [1, 8, 32], strides = [1, 1, 1]} : vector<1x10x32xf32> to vector<1x8x32xf32>
    %24 = vector.shape_cast %23 : vector<1x8x32xf32> to vector<8x32xf32>
    %25 = arith.truncf %24 : vector<8x32xf32> to vector<8x32xbf16>
    %26 = vector.extract_strided_slice %5 {offsets = [2, 0, 0], sizes = [1, 32, 96], strides = [1, 1, 1]} : vector<3x32x96xbf16> to vector<1x32x96xbf16>
    %27 = vector.shape_cast %26 : vector<1x32x96xbf16> to vector<32x96xbf16>
    %cst_12 = arith.constant dense<0.000000e+00> : vector<8x96xf32>
    %28 = tpu.matmul %25, %27, %cst_12 {dimension_numbers = #tpu.dot_dimension_numbers<[1], [0], [0], [1], [0, 0, 1, 1], [], []>} : vector<8x32xbf16>, vector<32x96xbf16>, vector<8x96xf32> -> vector<8x96xf32>
    %29 = arith.addf %22, %28 : vector<8x96xf32>
    %30 = vector.shape_cast %29 : vector<8x96xf32> to vector<1x8x96xf32>
    %cst_13 = arith.constant 0.000000e+00 : f32
    %31 = vector.broadcast %cst_13 : f32 to vector<1x8x96xf32>
    %32 = arith.maximumf %30, %31 : vector<1x8x96xf32>
    %c0_14 = arith.constant 0 : index
    %c0_15 = arith.constant 0 : index
    %33 = vector.load %arg7[%c0_14, %c0_15] : memref<1x96xf32, #tpu.memory_space<vmem>>, vector<1x96xf32>
    %c0_16 = arith.constant 0 : index
    %c0_17 = arith.constant 0 : index
    %34 = vector.load %arg8[%c0_16, %c0_17] : memref<1x96xf32, #tpu.memory_space<vmem>>, vector<1x96xf32>
    %35 = vector.extract_strided_slice %32 {offsets = [0, 0, 0], sizes = [1, 8, 32], strides = [1, 1, 1]} : vector<1x8x96xf32> to vector<1x8x32xf32>
    %cst_18 = arith.constant dense<0.000000e+00> : vector<1x8xf32>
    %36 = vector.multi_reduction <add>, %35, %cst_18 [2] : vector<1x8x32xf32> to vector<1x8xf32>
    %37 = vector.shape_cast %36 : vector<1x8xf32> to vector<1x8x1xf32>
    %cst_19 = arith.constant 3.200000e+01 : f32
    %38 = vector.broadcast %cst_19 : f32 to vector<1x8x1xf32>
    %39 = arith.divf %37, %38 : vector<1x8x1xf32>
    %40 = arith.mulf %35, %35 : vector<1x8x32xf32>
    %cst_20 = arith.constant dense<0.000000e+00> : vector<1x8xf32>
    %41 = vector.multi_reduction <add>, %40, %cst_20 [2] : vector<1x8x32xf32> to vector<1x8xf32>
    %42 = vector.shape_cast %41 : vector<1x8xf32> to vector<1x8x1xf32>
    %cst_21 = arith.constant 3.200000e+01 : f32
    %43 = vector.broadcast %cst_21 : f32 to vector<1x8x1xf32>
    %44 = arith.divf %42, %43 : vector<1x8x1xf32>
    %45 = arith.mulf %39, %39 : vector<1x8x1xf32>
    %46 = arith.subf %44, %45 : vector<1x8x1xf32>
    %47 = vector.broadcast %39 : vector<1x8x1xf32> to vector<1x8x32xf32>
    %48 = arith.subf %35, %47 : vector<1x8x32xf32>
    %cst_22 = arith.constant 9.99999974E-6 : f32
    %49 = vector.broadcast %cst_22 : f32 to vector<1x8x1xf32>
    %50 = arith.addf %46, %49 : vector<1x8x1xf32>
    %51 = math.rsqrt %50 : vector<1x8x1xf32>
    %52 = vector.broadcast %51 : vector<1x8x1xf32> to vector<1x8x32xf32>
    %53 = arith.mulf %48, %52 : vector<1x8x32xf32>
    %54 = vector.extract_strided_slice %32 {offsets = [0, 0, 32], sizes = [1, 8, 32], strides = [1, 1, 1]} : vector<1x8x96xf32> to vector<1x8x32xf32>
    %cst_23 = arith.constant dense<0.000000e+00> : vector<1x8xf32>
    %55 = vector.multi_reduction <add>, %54, %cst_23 [2] : vector<1x8x32xf32> to vector<1x8xf32>
    %56 = vector.shape_cast %55 : vector<1x8xf32> to vector<1x8x1xf32>
    %cst_24 = arith.constant 3.200000e+01 : f32
    %57 = vector.broadcast %cst_24 : f32 to vector<1x8x1xf32>
    %58 = arith.divf %56, %57 : vector<1x8x1xf32>
    %59 = arith.mulf %54, %54 : vector<1x8x32xf32>
    %cst_25 = arith.constant dense<0.000000e+00> : vector<1x8xf32>
    %60 = vector.multi_reduction <add>, %59, %cst_25 [2] : vector<1x8x32xf32> to vector<1x8xf32>
    %61 = vector.shape_cast %60 : vector<1x8xf32> to vector<1x8x1xf32>
    %cst_26 = arith.constant 3.200000e+01 : f32
    %62 = vector.broadcast %cst_26 : f32 to vector<1x8x1xf32>
    %63 = arith.divf %61, %62 : vector<1x8x1xf32>
    %64 = arith.mulf %58, %58 : vector<1x8x1xf32>
    %65 = arith.subf %63, %64 : vector<1x8x1xf32>
    %66 = vector.broadcast %58 : vector<1x8x1xf32> to vector<1x8x32xf32>
    %67 = arith.subf %54, %66 : vector<1x8x32xf32>
    %cst_27 = arith.constant 9.99999974E-6 : f32
    %68 = vector.broadcast %cst_27 : f32 to vector<1x8x1xf32>
    %69 = arith.addf %65, %68 : vector<1x8x1xf32>
    %70 = math.rsqrt %69 : vector<1x8x1xf32>
    %71 = vector.broadcast %70 : vector<1x8x1xf32> to vector<1x8x32xf32>
    %72 = arith.mulf %67, %71 : vector<1x8x32xf32>
    %73 = vector.extract_strided_slice %32 {offsets = [0, 0, 64], sizes = [1, 8, 32], strides = [1, 1, 1]} : vector<1x8x96xf32> to vector<1x8x32xf32>
    %cst_28 = arith.constant dense<0.000000e+00> : vector<1x8xf32>
    %74 = vector.multi_reduction <add>, %73, %cst_28 [2] : vector<1x8x32xf32> to vector<1x8xf32>
    %75 = vector.shape_cast %74 : vector<1x8xf32> to vector<1x8x1xf32>
    %cst_29 = arith.constant 3.200000e+01 : f32
    %76 = vector.broadcast %cst_29 : f32 to vector<1x8x1xf32>
    %77 = arith.divf %75, %76 : vector<1x8x1xf32>
    %78 = arith.mulf %73, %73 : vector<1x8x32xf32>
    %cst_30 = arith.constant dense<0.000000e+00> : vector<1x8xf32>
    %79 = vector.multi_reduction <add>, %78, %cst_30 [2] : vector<1x8x32xf32> to vector<1x8xf32>
    %80 = vector.shape_cast %79 : vector<1x8xf32> to vector<1x8x1xf32>
    %cst_31 = arith.constant 3.200000e+01 : f32
    %81 = vector.broadcast %cst_31 : f32 to vector<1x8x1xf32>
    %82 = arith.divf %80, %81 : vector<1x8x1xf32>
    %83 = arith.mulf %77, %77 : vector<1x8x1xf32>
    %84 = arith.subf %82, %83 : vector<1x8x1xf32>
    %85 = vector.broadcast %77 : vector<1x8x1xf32> to vector<1x8x32xf32>
    %86 = arith.subf %73, %85 : vector<1x8x32xf32>
    %cst_32 = arith.constant 9.99999974E-6 : f32
    %87 = vector.broadcast %cst_32 : f32 to vector<1x8x1xf32>
    %88 = arith.addf %84, %87 : vector<1x8x1xf32>
    %89 = math.rsqrt %88 : vector<1x8x1xf32>
    %90 = vector.broadcast %89 : vector<1x8x1xf32> to vector<1x8x32xf32>
    %91 = arith.mulf %86, %90 : vector<1x8x32xf32>
    %92 = tpu.concatenate %53, %72, %91 in 2 : vector<1x8x32xf32>, vector<1x8x32xf32>, vector<1x8x32xf32> -> vector<1x8x96xf32>
    %93 = vector.shape_cast %33 : vector<1x96xf32> to vector<1x1x96xf32>
    %94 = vector.broadcast %93 : vector<1x1x96xf32> to vector<1x8x96xf32>
    %95 = arith.mulf %92, %94 : vector<1x8x96xf32>
    %96 = vector.shape_cast %34 : vector<1x96xf32> to vector<1x1x96xf32>
    %97 = vector.broadcast %96 : vector<1x1x96xf32> to vector<1x8x96xf32>
    %98 = arith.addf %95, %97 : vector<1x8x96xf32>
    %99 = vector.broadcast %1 : vector<1x8x1xf32> to vector<1x8x96xf32>
    %100 = arith.mulf %98, %99 : vector<1x8x96xf32>
    %c0_33 = arith.constant 0 : index
    %c0_34 = arith.constant 0 : index
    %c0_35 = arith.constant 0 : index
    %c0_36 = arith.constant 0 : index
    %101 = vector.load %arg9[%c0_33, %c0_34, %c0_35, %c0_36] : memref<3x3x32x32xbf16, #tpu.memory_space<vmem>>, vector<3x3x32x32xbf16>
    %c0_37 = arith.constant 0 : index
    %c0_38 = arith.constant 0 : index
    %102 = vector.load %arg10[%c0_37, %c0_38] : memref<1x96xf32, #tpu.memory_space<vmem>>, vector<1x96xf32>
    %cst_39 = arith.constant 0.000000e+00 : f32
    %103 = vector.broadcast %cst_39 : f32 to vector<1x1x96xf32>
    %104 = tpu.concatenate %103, %100, %103 in 1 : vector<1x1x96xf32>, vector<1x8x96xf32>, vector<1x1x96xf32> -> vector<1x10x96xf32>
    %105 = vector.extract_strided_slice %104 {offsets = [0, 0, 0], sizes = [1, 10, 32], strides = [1, 1, 1]} : vector<1x10x96xf32> to vector<1x10x32xf32>
    %106 = vector.extract_strided_slice %105 {offsets = [0, 1, 0], sizes = [1, 8, 32], strides = [1, 1, 1]} : vector<1x10x32xf32> to vector<1x8x32xf32>
    %107 = vector.shape_cast %106 : vector<1x8x32xf32> to vector<8x32xf32>
    %108 = arith.truncf %107 : vector<8x32xf32> to vector<8x32xbf16>
    %109 = vector.extract_strided_slice %101 {offsets = [0, 1, 0, 0], sizes = [1, 1, 32, 32], strides = [1, 1, 1, 1]} : vector<3x3x32x32xbf16> to vector<1x1x32x32xbf16>
    %110 = vector.shape_cast %109 : vector<1x1x32x32xbf16> to vector<32x32xbf16>
    %cst_40 = arith.constant dense<0.000000e+00> : vector<8x32xf32>
    %111 = tpu.matmul %108, %110, %cst_40 {dimension_numbers = #tpu.dot_dimension_numbers<[1], [0], [0], [1], [0, 0, 1, 1], [], []>} : vector<8x32xbf16>, vector<32x32xbf16>, vector<8x32xf32> -> vector<8x32xf32>
    %112 = vector.extract_strided_slice %102 {offsets = [0, 0], sizes = [1, 32], strides = [1, 1]} : vector<1x96xf32> to vector<1x32xf32>
    %113 = vector.broadcast %112 : vector<1x32xf32> to vector<8x32xf32>
    %114 = arith.addf %111, %113 : vector<8x32xf32>
    %115 = vector.extract_strided_slice %105 {offsets = [0, 0, 0], sizes = [1, 8, 32], strides = [1, 1, 1]} : vector<1x10x32xf32> to vector<1x8x32xf32>
    %116 = vector.shape_cast %115 : vector<1x8x32xf32> to vector<8x32xf32>
    %117 = arith.truncf %116 : vector<8x32xf32> to vector<8x32xbf16>
    %118 = vector.extract_strided_slice %101 {offsets = [0, 0, 0, 0], sizes = [1, 1, 32, 32], strides = [1, 1, 1, 1]} : vector<3x3x32x32xbf16> to vector<1x1x32x32xbf16>
    %119 = vector.shape_cast %118 : vector<1x1x32x32xbf16> to vector<32x32xbf16>
    %cst_41 = arith.constant dense<0.000000e+00> : vector<8x32xf32>
    %120 = tpu.matmul %117, %119, %cst_41 {dimension_numbers = #tpu.dot_dimension_numbers<[1], [0], [0], [1], [0, 0, 1, 1], [], []>} : vector<8x32xbf16>, vector<32x32xbf16>, vector<8x32xf32> -> vector<8x32xf32>
    %121 = arith.addf %114, %120 : vector<8x32xf32>
    %122 = vector.extract_strided_slice %105 {offsets = [0, 2, 0], sizes = [1, 8, 32], strides = [1, 1, 1]} : vector<1x10x32xf32> to vector<1x8x32xf32>
    %123 = vector.shape_cast %122 : vector<1x8x32xf32> to vector<8x32xf32>
    %124 = arith.truncf %123 : vector<8x32xf32> to vector<8x32xbf16>
    %125 = vector.extract_strided_slice %101 {offsets = [0, 2, 0, 0], sizes = [1, 1, 32, 32], strides = [1, 1, 1, 1]} : vector<3x3x32x32xbf16> to vector<1x1x32x32xbf16>
    %126 = vector.shape_cast %125 : vector<1x1x32x32xbf16> to vector<32x32xbf16>
    %cst_42 = arith.constant dense<0.000000e+00> : vector<8x32xf32>
    %127 = tpu.matmul %124, %126, %cst_42 {dimension_numbers = #tpu.dot_dimension_numbers<[1], [0], [0], [1], [0, 0, 1, 1], [], []>} : vector<8x32xbf16>, vector<32x32xbf16>, vector<8x32xf32> -> vector<8x32xf32>
    %128 = arith.addf %121, %127 : vector<8x32xf32>
    %129 = vector.extract_strided_slice %104 {offsets = [0, 0, 32], sizes = [1, 10, 32], strides = [1, 1, 1]} : vector<1x10x96xf32> to vector<1x10x32xf32>
    %130 = vector.extract_strided_slice %129 {offsets = [0, 1, 0], sizes = [1, 8, 32], strides = [1, 1, 1]} : vector<1x10x32xf32> to vector<1x8x32xf32>
    %131 = vector.shape_cast %130 : vector<1x8x32xf32> to vector<8x32xf32>
    %132 = arith.truncf %131 : vector<8x32xf32> to vector<8x32xbf16>
    %133 = vector.extract_strided_slice %101 {offsets = [1, 1, 0, 0], sizes = [1, 1, 32, 32], strides = [1, 1, 1, 1]} : vector<3x3x32x32xbf16> to vector<1x1x32x32xbf16>
    %134 = vector.shape_cast %133 : vector<1x1x32x32xbf16> to vector<32x32xbf16>
    %cst_43 = arith.constant dense<0.000000e+00> : vector<8x32xf32>
    %135 = tpu.matmul %132, %134, %cst_43 {dimension_numbers = #tpu.dot_dimension_numbers<[1], [0], [0], [1], [0, 0, 1, 1], [], []>} : vector<8x32xbf16>, vector<32x32xbf16>, vector<8x32xf32> -> vector<8x32xf32>
    %136 = vector.extract_strided_slice %102 {offsets = [0, 32], sizes = [1, 32], strides = [1, 1]} : vector<1x96xf32> to vector<1x32xf32>
    %137 = vector.broadcast %136 : vector<1x32xf32> to vector<8x32xf32>
    %138 = arith.addf %135, %137 : vector<8x32xf32>
    %139 = vector.extract_strided_slice %129 {offsets = [0, 0, 0], sizes = [1, 8, 32], strides = [1, 1, 1]} : vector<1x10x32xf32> to vector<1x8x32xf32>
    %140 = vector.shape_cast %139 : vector<1x8x32xf32> to vector<8x32xf32>
    %141 = arith.truncf %140 : vector<8x32xf32> to vector<8x32xbf16>
    %142 = vector.extract_strided_slice %101 {offsets = [1, 0, 0, 0], sizes = [1, 1, 32, 32], strides = [1, 1, 1, 1]} : vector<3x3x32x32xbf16> to vector<1x1x32x32xbf16>
    %143 = vector.shape_cast %142 : vector<1x1x32x32xbf16> to vector<32x32xbf16>
    %cst_44 = arith.constant dense<0.000000e+00> : vector<8x32xf32>
    %144 = tpu.matmul %141, %143, %cst_44 {dimension_numbers = #tpu.dot_dimension_numbers<[1], [0], [0], [1], [0, 0, 1, 1], [], []>} : vector<8x32xbf16>, vector<32x32xbf16>, vector<8x32xf32> -> vector<8x32xf32>
    %145 = arith.addf %138, %144 : vector<8x32xf32>
    %146 = vector.extract_strided_slice %129 {offsets = [0, 2, 0], sizes = [1, 8, 32], strides = [1, 1, 1]} : vector<1x10x32xf32> to vector<1x8x32xf32>
    %147 = vector.shape_cast %146 : vector<1x8x32xf32> to vector<8x32xf32>
    %148 = arith.truncf %147 : vector<8x32xf32> to vector<8x32xbf16>
    %149 = vector.extract_strided_slice %101 {offsets = [1, 2, 0, 0], sizes = [1, 1, 32, 32], strides = [1, 1, 1, 1]} : vector<3x3x32x32xbf16> to vector<1x1x32x32xbf16>
    %150 = vector.shape_cast %149 : vector<1x1x32x32xbf16> to vector<32x32xbf16>
    %cst_45 = arith.constant dense<0.000000e+00> : vector<8x32xf32>
    %151 = tpu.matmul %148, %150, %cst_45 {dimension_numbers = #tpu.dot_dimension_numbers<[1], [0], [0], [1], [0, 0, 1, 1], [], []>} : vector<8x32xbf16>, vector<32x32xbf16>, vector<8x32xf32> -> vector<8x32xf32>
    %152 = arith.addf %145, %151 : vector<8x32xf32>
    %153 = vector.extract_strided_slice %104 {offsets = [0, 0, 64], sizes = [1, 10, 32], strides = [1, 1, 1]} : vector<1x10x96xf32> to vector<1x10x32xf32>
    %154 = vector.extract_strided_slice %153 {offsets = [0, 1, 0], sizes = [1, 8, 32], strides = [1, 1, 1]} : vector<1x10x32xf32> to vector<1x8x32xf32>
    %155 = vector.shape_cast %154 : vector<1x8x32xf32> to vector<8x32xf32>
    %156 = arith.truncf %155 : vector<8x32xf32> to vector<8x32xbf16>
    %157 = vector.extract_strided_slice %101 {offsets = [2, 1, 0, 0], sizes = [1, 1, 32, 32], strides = [1, 1, 1, 1]} : vector<3x3x32x32xbf16> to vector<1x1x32x32xbf16>
    %158 = vector.shape_cast %157 : vector<1x1x32x32xbf16> to vector<32x32xbf16>
    %cst_46 = arith.constant dense<0.000000e+00> : vector<8x32xf32>
    %159 = tpu.matmul %156, %158, %cst_46 {dimension_numbers = #tpu.dot_dimension_numbers<[1], [0], [0], [1], [0, 0, 1, 1], [], []>} : vector<8x32xbf16>, vector<32x32xbf16>, vector<8x32xf32> -> vector<8x32xf32>
    %160 = vector.extract_strided_slice %102 {offsets = [0, 64], sizes = [1, 32], strides = [1, 1]} : vector<1x96xf32> to vector<1x32xf32>
    %161 = vector.broadcast %160 : vector<1x32xf32> to vector<8x32xf32>
    %162 = arith.addf %159, %161 : vector<8x32xf32>
    %163 = vector.extract_strided_slice %153 {offsets = [0, 0, 0], sizes = [1, 8, 32], strides = [1, 1, 1]} : vector<1x10x32xf32> to vector<1x8x32xf32>
    %164 = vector.shape_cast %163 : vector<1x8x32xf32> to vector<8x32xf32>
    %165 = arith.truncf %164 : vector<8x32xf32> to vector<8x32xbf16>
    %166 = vector.extract_strided_slice %101 {offsets = [2, 0, 0, 0], sizes = [1, 1, 32, 32], strides = [1, 1, 1, 1]} : vector<3x3x32x32xbf16> to vector<1x1x32x32xbf16>
    %167 = vector.shape_cast %166 : vector<1x1x32x32xbf16> to vector<32x32xbf16>
    %cst_47 = arith.constant dense<0.000000e+00> : vector<8x32xf32>
    %168 = tpu.matmul %165, %167, %cst_47 {dimension_numbers = #tpu.dot_dimension_numbers<[1], [0], [0], [1], [0, 0, 1, 1], [], []>} : vector<8x32xbf16>, vector<32x32xbf16>, vector<8x32xf32> -> vector<8x32xf32>
    %169 = arith.addf %162, %168 : vector<8x32xf32>
    %170 = vector.extract_strided_slice %153 {offsets = [0, 2, 0], sizes = [1, 8, 32], strides = [1, 1, 1]} : vector<1x10x32xf32> to vector<1x8x32xf32>
    %171 = vector.shape_cast %170 : vector<1x8x32xf32> to vector<8x32xf32>
    %172 = arith.truncf %171 : vector<8x32xf32> to vector<8x32xbf16>
    %173 = vector.extract_strided_slice %101 {offsets = [2, 2, 0, 0], sizes = [1, 1, 32, 32], strides = [1, 1, 1, 1]} : vector<3x3x32x32xbf16> to vector<1x1x32x32xbf16>
    %174 = vector.shape_cast %173 : vector<1x1x32x32xbf16> to vector<32x32xbf16>
    %cst_48 = arith.constant dense<0.000000e+00> : vector<8x32xf32>
    %175 = tpu.matmul %172, %174, %cst_48 {dimension_numbers = #tpu.dot_dimension_numbers<[1], [0], [0], [1], [0, 0, 1, 1], [], []>} : vector<8x32xbf16>, vector<32x32xbf16>, vector<8x32xf32> -> vector<8x32xf32>
    %176 = arith.addf %169, %175 : vector<8x32xf32>
    %177 = tpu.concatenate %128, %152, %176 in 1 : vector<8x32xf32>, vector<8x32xf32>, vector<8x32xf32> -> vector<8x96xf32>
    %178 = vector.shape_cast %177 : vector<8x96xf32> to vector<1x8x96xf32>
    %cst_49 = arith.constant 0.000000e+00 : f32
    %179 = vector.broadcast %cst_49 : f32 to vector<1x8x96xf32>
    %180 = arith.maximumf %178, %179 : vector<1x8x96xf32>
    %c0_50 = arith.constant 0 : index
    %c0_51 = arith.constant 0 : index
    %181 = vector.load %arg11[%c0_50, %c0_51] : memref<1x96xf32, #tpu.memory_space<vmem>>, vector<1x96xf32>
    %c0_52 = arith.constant 0 : index
    %c0_53 = arith.constant 0 : index
    %182 = vector.load %arg12[%c0_52, %c0_53] : memref<1x96xf32, #tpu.memory_space<vmem>>, vector<1x96xf32>
    %183 = vector.extract_strided_slice %180 {offsets = [0, 0, 0], sizes = [1, 8, 32], strides = [1, 1, 1]} : vector<1x8x96xf32> to vector<1x8x32xf32>
    %cst_54 = arith.constant dense<0.000000e+00> : vector<1x8xf32>
    %184 = vector.multi_reduction <add>, %183, %cst_54 [2] : vector<1x8x32xf32> to vector<1x8xf32>
    %185 = vector.shape_cast %184 : vector<1x8xf32> to vector<1x8x1xf32>
    %cst_55 = arith.constant 3.200000e+01 : f32
    %186 = vector.broadcast %cst_55 : f32 to vector<1x8x1xf32>
    %187 = arith.divf %185, %186 : vector<1x8x1xf32>
    %188 = arith.mulf %183, %183 : vector<1x8x32xf32>
    %cst_56 = arith.constant dense<0.000000e+00> : vector<1x8xf32>
    %189 = vector.multi_reduction <add>, %188, %cst_56 [2] : vector<1x8x32xf32> to vector<1x8xf32>
    %190 = vector.shape_cast %189 : vector<1x8xf32> to vector<1x8x1xf32>
    %cst_57 = arith.constant 3.200000e+01 : f32
    %191 = vector.broadcast %cst_57 : f32 to vector<1x8x1xf32>
    %192 = arith.divf %190, %191 : vector<1x8x1xf32>
    %193 = arith.mulf %187, %187 : vector<1x8x1xf32>
    %194 = arith.subf %192, %193 : vector<1x8x1xf32>
    %195 = vector.broadcast %187 : vector<1x8x1xf32> to vector<1x8x32xf32>
    %196 = arith.subf %183, %195 : vector<1x8x32xf32>
    %cst_58 = arith.constant 9.99999974E-6 : f32
    %197 = vector.broadcast %cst_58 : f32 to vector<1x8x1xf32>
    %198 = arith.addf %194, %197 : vector<1x8x1xf32>
    %199 = math.rsqrt %198 : vector<1x8x1xf32>
    %200 = vector.broadcast %199 : vector<1x8x1xf32> to vector<1x8x32xf32>
    %201 = arith.mulf %196, %200 : vector<1x8x32xf32>
    %202 = vector.extract_strided_slice %180 {offsets = [0, 0, 32], sizes = [1, 8, 32], strides = [1, 1, 1]} : vector<1x8x96xf32> to vector<1x8x32xf32>
    %cst_59 = arith.constant dense<0.000000e+00> : vector<1x8xf32>
    %203 = vector.multi_reduction <add>, %202, %cst_59 [2] : vector<1x8x32xf32> to vector<1x8xf32>
    %204 = vector.shape_cast %203 : vector<1x8xf32> to vector<1x8x1xf32>
    %cst_60 = arith.constant 3.200000e+01 : f32
    %205 = vector.broadcast %cst_60 : f32 to vector<1x8x1xf32>
    %206 = arith.divf %204, %205 : vector<1x8x1xf32>
    %207 = arith.mulf %202, %202 : vector<1x8x32xf32>
    %cst_61 = arith.constant dense<0.000000e+00> : vector<1x8xf32>
    %208 = vector.multi_reduction <add>, %207, %cst_61 [2] : vector<1x8x32xf32> to vector<1x8xf32>
    %209 = vector.shape_cast %208 : vector<1x8xf32> to vector<1x8x1xf32>
    %cst_62 = arith.constant 3.200000e+01 : f32
    %210 = vector.broadcast %cst_62 : f32 to vector<1x8x1xf32>
    %211 = arith.divf %209, %210 : vector<1x8x1xf32>
    %212 = arith.mulf %206, %206 : vector<1x8x1xf32>
    %213 = arith.subf %211, %212 : vector<1x8x1xf32>
    %214 = vector.broadcast %206 : vector<1x8x1xf32> to vector<1x8x32xf32>
    %215 = arith.subf %202, %214 : vector<1x8x32xf32>
    %cst_63 = arith.constant 9.99999974E-6 : f32
    %216 = vector.broadcast %cst_63 : f32 to vector<1x8x1xf32>
    %217 = arith.addf %213, %216 : vector<1x8x1xf32>
    %218 = math.rsqrt %217 : vector<1x8x1xf32>
    %219 = vector.broadcast %218 : vector<1x8x1xf32> to vector<1x8x32xf32>
    %220 = arith.mulf %215, %219 : vector<1x8x32xf32>
    %221 = vector.extract_strided_slice %180 {offsets = [0, 0, 64], sizes = [1, 8, 32], strides = [1, 1, 1]} : vector<1x8x96xf32> to vector<1x8x32xf32>
    %cst_64 = arith.constant dense<0.000000e+00> : vector<1x8xf32>
    %222 = vector.multi_reduction <add>, %221, %cst_64 [2] : vector<1x8x32xf32> to vector<1x8xf32>
    %223 = vector.shape_cast %222 : vector<1x8xf32> to vector<1x8x1xf32>
    %cst_65 = arith.constant 3.200000e+01 : f32
    %224 = vector.broadcast %cst_65 : f32 to vector<1x8x1xf32>
    %225 = arith.divf %223, %224 : vector<1x8x1xf32>
    %226 = arith.mulf %221, %221 : vector<1x8x32xf32>
    %cst_66 = arith.constant dense<0.000000e+00> : vector<1x8xf32>
    %227 = vector.multi_reduction <add>, %226, %cst_66 [2] : vector<1x8x32xf32> to vector<1x8xf32>
    %228 = vector.shape_cast %227 : vector<1x8xf32> to vector<1x8x1xf32>
    %cst_67 = arith.constant 3.200000e+01 : f32
    %229 = vector.broadcast %cst_67 : f32 to vector<1x8x1xf32>
    %230 = arith.divf %228, %229 : vector<1x8x1xf32>
    %231 = arith.mulf %225, %225 : vector<1x8x1xf32>
    %232 = arith.subf %230, %231 : vector<1x8x1xf32>
    %233 = vector.broadcast %225 : vector<1x8x1xf32> to vector<1x8x32xf32>
    %234 = arith.subf %221, %233 : vector<1x8x32xf32>
    %cst_68 = arith.constant 9.99999974E-6 : f32
    %235 = vector.broadcast %cst_68 : f32 to vector<1x8x1xf32>
    %236 = arith.addf %232, %235 : vector<1x8x1xf32>
    %237 = math.rsqrt %236 : vector<1x8x1xf32>
    %238 = vector.broadcast %237 : vector<1x8x1xf32> to vector<1x8x32xf32>
    %239 = arith.mulf %234, %238 : vector<1x8x32xf32>
    %240 = tpu.concatenate %201, %220, %239 in 2 : vector<1x8x32xf32>, vector<1x8x32xf32>, vector<1x8x32xf32> -> vector<1x8x96xf32>
    %241 = vector.shape_cast %181 : vector<1x96xf32> to vector<1x1x96xf32>
    %242 = vector.broadcast %241 : vector<1x1x96xf32> to vector<1x8x96xf32>
    %243 = arith.mulf %240, %242 : vector<1x8x96xf32>
    %244 = vector.shape_cast %182 : vector<1x96xf32> to vector<1x1x96xf32>
    %245 = vector.broadcast %244 : vector<1x1x96xf32> to vector<1x8x96xf32>
    %246 = arith.addf %243, %245 : vector<1x8x96xf32>
    %c0_69 = arith.constant 0 : index
    %c0_70 = arith.constant 0 : index
    %247 = vector.load %arg13[%c0_69, %c0_70] : memref<1x96xf32, #tpu.memory_space<vmem>>, vector<1x96xf32>
    %248 = vector.shape_cast %247 : vector<1x96xf32> to vector<1x1x96xf32>
    %249 = vector.broadcast %248 : vector<1x1x96xf32> to vector<1x8x96xf32>
    %250 = arith.mulf %246, %249 : vector<1x8x96xf32>
    %251 = vector.shape_cast %1 : vector<1x8x1xf32> to vector<1x8xf32>
    %252 = vector.extract_strided_slice %250 {offsets = [0, 0, 0], sizes = [1, 8, 32], strides = [1, 1, 1]} : vector<1x8x96xf32> to vector<1x8x32xf32>
    %cst_71 = arith.constant dense<0.000000e+00> : vector<1x8xf32>
    %253 = vector.multi_reduction <add>, %252, %cst_71 [2] : vector<1x8x32xf32> to vector<1x8xf32>
    %c0_72 = arith.constant 0 : index
    %254 = memref.load %arg2[%c0_72] : memref<3xf32, #tpu.memory_space<smem>>
    %255 = vector.broadcast %254 : f32 to vector<1x8xf32>
    %256 = arith.addf %253, %255 : vector<1x8xf32>
    %257 = arith.mulf %256, %251 : vector<1x8xf32>
    %258 = vector.extract_strided_slice %250 {offsets = [0, 0, 32], sizes = [1, 8, 32], strides = [1, 1, 1]} : vector<1x8x96xf32> to vector<1x8x32xf32>
    %cst_73 = arith.constant dense<0.000000e+00> : vector<1x8xf32>
    %259 = vector.multi_reduction <add>, %258, %cst_73 [2] : vector<1x8x32xf32> to vector<1x8xf32>
    %c1 = arith.constant 1 : index
    %260 = memref.load %arg2[%c1] : memref<3xf32, #tpu.memory_space<smem>>
    %261 = vector.broadcast %260 : f32 to vector<1x8xf32>
    %262 = arith.addf %259, %261 : vector<1x8xf32>
    %263 = arith.mulf %262, %251 : vector<1x8xf32>
    %c0_74 = arith.constant 0 : index
    %264 = memref.load %arg1[%c0_74] : memref<3xf32, #tpu.memory_space<smem>>
    %265 = vector.broadcast %264 : f32 to vector<1x8xf32>
    %266 = arith.mulf %263, %265 : vector<1x8xf32>
    %267 = vector.extract_strided_slice %250 {offsets = [0, 0, 64], sizes = [1, 8, 32], strides = [1, 1, 1]} : vector<1x8x96xf32> to vector<1x8x32xf32>
    %cst_75 = arith.constant dense<0.000000e+00> : vector<1x8xf32>
    %268 = vector.multi_reduction <add>, %267, %cst_75 [2] : vector<1x8x32xf32> to vector<1x8xf32>
    %c2 = arith.constant 2 : index
    %269 = memref.load %arg2[%c2] : memref<3xf32, #tpu.memory_space<smem>>
    %270 = vector.broadcast %269 : f32 to vector<1x8xf32>
    %271 = arith.addf %268, %270 : vector<1x8xf32>
    %272 = arith.mulf %271, %251 : vector<1x8xf32>
    %c1_76 = arith.constant 1 : index
    %273 = memref.load %arg1[%c1_76] : memref<3xf32, #tpu.memory_space<smem>>
    %274 = vector.broadcast %273 : f32 to vector<1x8xf32>
    %275 = arith.mulf %272, %274 : vector<1x8xf32>
    %276 = math.exp %257 : vector<1x8xf32>
    %cst_77 = arith.constant 1.000000e+00 : f32
    %277 = vector.broadcast %cst_77 : f32 to vector<1x8xf32>
    %278 = arith.subf %276, %277 : vector<1x8xf32>
    %279 = math.roundeven %278 : vector<1x8xf32>
    %cst_78 = arith.constant 0.000000e+00 : f32
    %280 = vector.broadcast %cst_78 : f32 to vector<1x8xf32>
    %281 = arith.maximumf %279, %280 : vector<1x8xf32>
    %c2_79 = arith.constant 2 : index
    %282 = memref.load %arg1[%c2_79] : memref<3xf32, #tpu.memory_space<smem>>
    %283 = vector.broadcast %282 : f32 to vector<1x8xf32>
    %284 = arith.mulf %281, %283 : vector<1x8xf32>
    %c0_80 = arith.constant 0 : index
    %c0_81 = arith.constant 0 : index
    %285 = vector.load %arg14[%c0_80, %c0_81] : memref<1x7xf32, #tpu.memory_space<vmem>>, vector<1x7xf32>
    %c0_82 = arith.constant 0 : index
    %c0_83 = arith.constant 0 : index
    %286 = vector.load %arg15[%c0_82, %c0_83] : memref<1x7xf32, #tpu.memory_space<vmem>>, vector<1x7xf32>
    %287 = vector.shape_cast %266 : vector<1x8xf32> to vector<1x8x1xf32>
    %288 = vector.shape_cast %285 : vector<1x7xf32> to vector<1x1x7xf32>
    %289 = vector.broadcast %287 : vector<1x8x1xf32> to vector<1x8x7xf32>
    %290 = vector.broadcast %288 : vector<1x1x7xf32> to vector<1x8x7xf32>
    %291 = arith.cmpf ogt, %289, %290 : vector<1x8x7xf32>
    %292 = arith.extui %291 : vector<1x8x7xi1> to vector<1x8x7xi32>
    %cst_84 = arith.constant dense<0> : vector<1x8xi32>
    %293 = vector.multi_reduction <add>, %292, %cst_84 [2] : vector<1x8x7xi32> to vector<1x8xi32>
    %294 = vector.shape_cast %275 : vector<1x8xf32> to vector<1x8x1xf32>
    %295 = vector.shape_cast %286 : vector<1x7xf32> to vector<1x1x7xf32>
    %296 = vector.broadcast %294 : vector<1x8x1xf32> to vector<1x8x7xf32>
    %297 = vector.broadcast %295 : vector<1x1x7xf32> to vector<1x8x7xf32>
    %298 = arith.cmpf ogt, %296, %297 : vector<1x8x7xf32>
    %299 = arith.extui %298 : vector<1x8x7xi1> to vector<1x8x7xi32>
    %cst_85 = arith.constant dense<0> : vector<1x8xi32>
    %300 = vector.multi_reduction <add>, %299, %cst_85 [2] : vector<1x8x7xi32> to vector<1x8xi32>
    %301 = tpu.iota {dimensions = array<i32: 1>} : vector<8x16xi32>
    %302 = vector.shape_cast %293 : vector<1x8xi32> to vector<8x1xi32>
    %303 = vector.broadcast %302 : vector<8x1xi32> to vector<8x16xi32>
    %304 = arith.cmpi eq, %301, %303 : vector<8x16xi32>
    %305 = vector.shape_cast %300 : vector<1x8xi32> to vector<8x1xi32>
    %c8_i32 = arith.constant 8 : i32
    %306 = vector.broadcast %c8_i32 : i32 to vector<8x1xi32>
    %307 = arith.addi %305, %306 : vector<8x1xi32>
    %308 = vector.broadcast %307 : vector<8x1xi32> to vector<8x16xi32>
    %309 = arith.cmpi eq, %301, %308 : vector<8x16xi32>
    %310 = arith.ori %304, %309 : vector<8x16xi1>
    %311 = arith.extui %310 : vector<8x16xi1> to vector<8x16xi32>
    %312 = arith.sitofp %311 : vector<8x16xi32> to vector<8x16xf32>
    %c0_86 = arith.constant 0 : index
    %c0_87 = arith.constant 0 : index
    %313 = vector.load %arg16[%c0_86, %c0_87] : memref<16x32xf32, #tpu.memory_space<vmem>>, vector<16x32xf32>
    %cst_88 = arith.constant dense<0.000000e+00> : vector<8x32xf32>
    %314 = tpu.matmul %312, %313, %cst_88 {dimension_numbers = #tpu.dot_dimension_numbers<[1], [0], [0], [1], [0, 0, 1, 1], [], []>} : vector<8x16xf32>, vector<16x32xf32>, vector<8x32xf32> -> vector<8x32xf32>
    %315 = vector.shape_cast %314 : vector<8x32xf32> to vector<1x8x32xf32>
    %316 = arith.addf %0, %315 : vector<1x8x32xf32>
    %c0_89 = arith.constant 0 : index
    %c0_90 = arith.constant 0 : index
    %c0_91 = arith.constant 0 : index
    %317 = vector.load %arg17[%c0_89, %c0_90, %c0_91] : memref<1x8x32xf32, #tpu.memory_space<vmem>>, vector<1x8x32xf32>
    tpu.vector_store %arg17[%c0_89, %c0_90, %c0_91], %316 {strides = array<i32>} : memref<1x8x32xf32, #tpu.memory_space<vmem>>, vector<1x8x32xf32>,
    %318 = vector.shape_cast %257 : vector<1x8xf32> to vector<1x1x8xf32>
    %319 = vector.shape_cast %266 : vector<1x8xf32> to vector<1x1x8xf32>
    %320 = vector.shape_cast %275 : vector<1x8xf32> to vector<1x1x8xf32>
    %321 = vector.shape_cast %284 : vector<1x8xf32> to vector<1x1x8xf32>
    %322 = tpu.concatenate %318, %319, %320, %321 in 1 : vector<1x1x8xf32>, vector<1x1x8xf32>, vector<1x1x8xf32>, vector<1x1x8xf32> -> vector<1x4x8xf32>
    %c0_92 = arith.constant 0 : index
    %c0_93 = arith.constant 0 : index
    %c0_94 = arith.constant 0 : index
    %323 = vector.load %arg18[%c0_92, %c0_93, %c0_94] : memref<1x4x8xf32, #tpu.memory_space<vmem>>, vector<1x4x8xf32>
    tpu.vector_store %arg18[%c0_92, %c0_93, %c0_94], %322 {strides = array<i32>} : memref<1x4x8xf32, #tpu.memory_space<vmem>>, vector<1x4x8xf32>,
    return
  }
  func.func @transform_0(%arg0: i32) -> i32 {
    %c0_i32 = arith.constant 0 : i32
    %c0_i32_0 = arith.constant 0 : i32
    return %c0_i32 : i32
  }
  func.func @transform_1(%arg0: i32) -> i32 {
    %c0_i32 = arith.constant 0 : i32
    %c0_i32_0 = arith.constant 0 : i32
    return %c0_i32 : i32
  }
  func.func @transform_2(%arg0: i32) -> (i32, i32, i32) {
    %c0_i32 = arith.constant 0 : i32
    %c0_i32_0 = arith.constant 0 : i32
    %c0_i32_1 = arith.constant 0 : i32
    return %arg0, %c0_i32, %c0_i32_0 : i32, i32, i32
  }
  func.func @transform_3(%arg0: i32) -> (i32, i32, i32) {
    %c0_i32 = arith.constant 0 : i32
    %c0_i32_0 = arith.constant 0 : i32
    %c0_i32_1 = arith.constant 0 : i32
    return %arg0, %c0_i32, %c0_i32_0 : i32, i32, i32
  }
  func.func @transform_4(%arg0: i32) -> (i32, i32, i32) {
    %c0_i32 = arith.constant 0 : i32
    %c0_i32_0 = arith.constant 0 : i32
    %c0_i32_1 = arith.constant 0 : i32
    %c0_i32_2 = arith.constant 0 : i32
    return %c0_i32, %c0_i32_0, %c0_i32_1 : i32, i32, i32
  }
  func.func @transform_5(%arg0: i32) -> (i32, i32) {
    %c0_i32 = arith.constant 0 : i32
    %c0_i32_0 = arith.constant 0 : i32
    %c0_i32_1 = arith.constant 0 : i32
    return %c0_i32, %c0_i32_0 : i32, i32
  }
  func.func @transform_6(%arg0: i32) -> (i32, i32) {
    %c0_i32 = arith.constant 0 : i32
    %c0_i32_0 = arith.constant 0 : i32
    %c0_i32_1 = arith.constant 0 : i32
    return %c0_i32, %c0_i32_0 : i32, i32
  }
  func.func @transform_7(%arg0: i32) -> (i32, i32) {
    %c0_i32 = arith.constant 0 : i32
    %c0_i32_0 = arith.constant 0 : i32
    %c0_i32_1 = arith.constant 0 : i32
    return %c0_i32, %c0_i32_0 : i32, i32
  }
  func.func @transform_8(%arg0: i32) -> (i32, i32, i32, i32) {
    %c0_i32 = arith.constant 0 : i32
    %c0_i32_0 = arith.constant 0 : i32
    %c0_i32_1 = arith.constant 0 : i32
    %c0_i32_2 = arith.constant 0 : i32
    %c0_i32_3 = arith.constant 0 : i32
    return %c0_i32, %c0_i32_0, %c0_i32_1, %c0_i32_2 : i32, i32, i32, i32
  }
  func.func @transform_9(%arg0: i32) -> (i32, i32) {
    %c0_i32 = arith.constant 0 : i32
    %c0_i32_0 = arith.constant 0 : i32
    %c0_i32_1 = arith.constant 0 : i32
    return %c0_i32, %c0_i32_0 : i32, i32
  }
  func.func @transform_10(%arg0: i32) -> (i32, i32) {
    %c0_i32 = arith.constant 0 : i32
    %c0_i32_0 = arith.constant 0 : i32
    %c0_i32_1 = arith.constant 0 : i32
    return %c0_i32, %c0_i32_0 : i32, i32
  }
  func.func @transform_11(%arg0: i32) -> (i32, i32) {
    %c0_i32 = arith.constant 0 : i32
    %c0_i32_0 = arith.constant 0 : i32
    %c0_i32_1 = arith.constant 0 : i32
    return %c0_i32, %c0_i32_0 : i32, i32
  }
  func.func @transform_12(%arg0: i32) -> (i32, i32) {
    %c0_i32 = arith.constant 0 : i32
    %c0_i32_0 = arith.constant 0 : i32
    %c0_i32_1 = arith.constant 0 : i32
    return %c0_i32, %c0_i32_0 : i32, i32
  }
  func.func @transform_13(%arg0: i32) -> (i32, i32) {
    %c0_i32 = arith.constant 0 : i32
    %c0_i32_0 = arith.constant 0 : i32
    %c0_i32_1 = arith.constant 0 : i32
    return %c0_i32, %c0_i32_0 : i32, i32
  }
  func.func @transform_14(%arg0: i32) -> (i32, i32) {
    %c0_i32 = arith.constant 0 : i32
    %c0_i32_0 = arith.constant 0 : i32
    %c0_i32_1 = arith.constant 0 : i32
    return %c0_i32, %c0_i32_0 : i32, i32
  }
  func.func @transform_15(%arg0: i32) -> (i32, i32) {
    %c0_i32 = arith.constant 0 : i32
    %c0_i32_0 = arith.constant 0 : i32
    %c0_i32_1 = arith.constant 0 : i32
    return %c0_i32, %c0_i32_0 : i32, i32
  }
  func.func @transform_16(%arg0: i32) -> (i32, i32, i32) {
    %c0_i32 = arith.constant 0 : i32
    %c0_i32_0 = arith.constant 0 : i32
    %c0_i32_1 = arith.constant 0 : i32
    return %arg0, %c0_i32, %c0_i32_0 : i32, i32, i32
  }
  func.func @transform_17(%arg0: i32) -> (i32, i32, i32) {
    %c0_i32 = arith.constant 0 : i32
    %c0_i32_0 = arith.constant 0 : i32
    %c0_i32_1 = arith.constant 0 : i32
    return %arg0, %c0_i32, %c0_i32_0 : i32, i32, i32
  }
}

</mosaic_0001>

<llo_original>
// kernel: tpu_custom_call.1
$region0: #{tpu_custom_call.1}
  #allocation0 [shape = 'u32[]', space=smem, size = 0x4, offset = 0x4, fixed_abs, tag = 'smem constant byte address 0x4 - core index']
  #allocation1 [shape = 'u32[144,128]{1,0:T(1,128)}', space=vmem, size = 0x12000, scoped, tag = 'internal scratch']
  %s0 = inlined_call_operand.vmem [shape: f32[3], index: 0, kind: input, shape index: {}]
  %s1 = inlined_call_operand.hbm [shape: f32[3], index: 1, kind: input, shape index: {}]
  %s2 = inlined_call_operand.vmem [shape: f32[2,8,32], index: 2, kind: input, shape index: {}]
  %s3 = inlined_call_operand.vmem [shape: f32[2,8,1], index: 3, kind: input, shape index: {}]
  %s4 = inlined_call_operand.hbm [shape: bf16[3,32,96], index: 4, kind: input, shape index: {}]
  %s5 = inlined_call_operand.vmem [shape: f32[1,96], index: 5, kind: input, shape index: {}]
  %s6 = inlined_call_operand.vmem [shape: f32[1,96], index: 6, kind: input, shape index: {}]
  %s7 = inlined_call_operand.vmem [shape: f32[1,96], index: 7, kind: input, shape index: {}]
  %s8 = inlined_call_operand.hbm [shape: bf16[3,3,32,32], index: 8, kind: input, shape index: {}]
  %s9 = inlined_call_operand.vmem [shape: f32[1,96], index: 9, kind: input, shape index: {}]
  %s10 = inlined_call_operand.vmem [shape: f32[1,96], index: 10, kind: input, shape index: {}]
  %s11 = inlined_call_operand.vmem [shape: f32[1,96], index: 11, kind: input, shape index: {}]
  %s12 = inlined_call_operand.vmem [shape: f32[1,96], index: 12, kind: input, shape index: {}]
  %s13 = inlined_call_operand.vmem [shape: f32[1,7], index: 13, kind: input, shape index: {}]
  %s14 = inlined_call_operand.vmem [shape: f32[1,7], index: 14, kind: input, shape index: {}]
  %s15 = inlined_call_operand.vmem [shape: f32[16,32], index: 15, kind: input, shape index: {}]
  %s16 = inlined_call_operand.hbm [shape: f32[2,8,32], index: 16, kind: output, shape index: {0}]
  %s17 = inlined_call_operand.hbm [shape: f32[2,4,8], index: 17, kind: output, shape index: {1}]
  %18 = xla_tuple %s16, %s17
  %s19 = sld [smem:[#allocation0]]
  $region121: #{tpu_custom_call.1} parent=0
    _
  %s21 = ssub.s32 1, %s19
  %s22 = scalar_select 0, %s21, %s19
  $region1: #{tpu_custom_call.1} parent=0
    #allocation2 [shape = 'u8[512]{0}', space=smem, size = 0x200, scoped, tag = 'input window, operand 0, single buffered']
    #allocation3 [shape = 's32[2]{0}', space=sflag, size = 0x8, scoped, tag = 'scoped memory for tpu_custom_call.1']
    #allocation4 [shape = 's32[2]{0}', space=sflag, size = 0x8, scoped, tag = 'scoped memory for tpu_custom_call.1']
    #allocation5 [shape = 's32[2]{0}', space=sflag, size = 0x8, scoped, tag = 'scoped memory for tpu_custom_call.1']
    #allocation6 [shape = 's32[2]{0}', space=sflag, size = 0x8, scoped, tag = 'scoped memory for tpu_custom_call.1']
    #allocation7 [shape = 'u8[512]{0}', space=smem, size = 0x200, scoped, tag = 'input window, operand 1, single buffered']
    #allocation8 [shape = 'u8[24576]{0}', space=vmem, size = 0x6000, scoped, tag = 'input window, operand 4, single buffered']
    #allocation9 [shape = 'u8[73728]{0}', space=vmem, size = 0x12000, scoped, tag = 'input window, operand 8, single buffered']
    #allocation10 [shape = 's32[1]{0}', space=sflag, size = 0x4, scoped, tag = 'scoped memory for tpu_custom_call.1']
    #allocation11 [shape = 'u8[8192]{0}', space=vmem, size = 0x2000, scoped, tag = 'output window, operand 0']
    #allocation12 [shape = 'u8[4096]{0}', space=vmem, size = 0x1000, scoped, tag = 'output window, operand 1']
    #allocation13 [shape = 's32[2]{0}', space=sflag, size = 0x8, scoped, tag = 'scoped memory for tpu_custom_call.1']
    %23 = vsyncpa [#allocation6], 0
    %24 = vsyncpa [#allocation5], 0
    %25 = vsyncpa [#allocation3], 0
    %26 = vsyncpa [#allocation10], 0
    %27 = vsyncpa [#allocation4], 0
    %s28 = scalar_lea.sflag [#allocation4], 1
    %29 = vsyncpa %s28, 0
    %30 = vsyncpa [#allocation13], 0
    %s31 = scalar_lea.sflag [#allocation13], 1
    %32 = vsyncpa %s31, 0
    loop: start=0, step=1, limit=4
    $region2: #{tpu_custom_call.1} parent=1 // loop_pre_header
      _
    $region3: #{tpu_custom_call.1} parent=1 // loop_header
      %s34 = sphi 0, %s38
      %p35 = scmp.ge.s32.totalorder %s34, 4
      %s42 = sphi 0, %s42
      %s44 = sphi 0, %s42
      %s45 = sphi 0, %s44
      %s59 = sphi 0, %s45
      %s63 = sphi 0, %s63
      %s65 = sphi 0, %s63
      %s66 = sphi 0, %s65
      %s80 = sphi 0, %s66
      %s86 = sphi 0, %s88
      %s89 = sphi 0, %s86
      %s90 = sphi 0, %s89
      %s106 = sphi 0, %s90
      %s112 = sphi 0, %s114
      %s115 = sphi 0, %s112
      %s116 = sphi 0, %s115
      %s132 = sphi 0, %s116
      %s136 = sphi 0, %s136
      %s138 = sphi 0, %s136
      %s139 = sphi 0, %s138
      %s153 = sphi 0, %s139
      %s157 = sphi 0, %s157
      %s159 = sphi 0, %s157
      %s160 = sphi 0, %s159
      %s174 = sphi 0, %s160
      %s178 = sphi 0, %s178
      %s180 = sphi 0, %s178
      %s181 = sphi 0, %s180
      %s195 = sphi 0, %s181
      %s199 = sphi 0, %s199
      %s201 = sphi 0, %s199
      %s202 = sphi 0, %s201
      %s216 = sphi 0, %s202
      %s220 = sphi 0, %s220
      %s222 = sphi 0, %s220
      %s223 = sphi 0, %s222
      %s237 = sphi 0, %s223
      %s241 = sphi 0, %s241
      %s243 = sphi 0, %s241
      %s244 = sphi 0, %s243
      %s258 = sphi 0, %s244
      %s262 = sphi 0, %s262
      %s264 = sphi 0, %s262
      %s265 = sphi 0, %s264
      %s279 = sphi 0, %s265
      %s283 = sphi 0, %s283
      %s285 = sphi 0, %s283
      %s286 = sphi 0, %s285
      %s300 = sphi 0, %s286
      %s304 = sphi 0, %s304
      %s306 = sphi 0, %s304
      %s307 = sphi 0, %s306
      %s321 = sphi 0, %s307
      %s325 = sphi 0, %s325
      %s327 = sphi 0, %s325
      %s328 = sphi 0, %s327
      %s342 = sphi 0, %s328
      %s346 = sphi 0, %s346
      %s348 = sphi 0, %s346
      %s349 = sphi 0, %s348
      %s363 = sphi 0, %s349
      %s367 = sphi 0, %s367
      %s369 = sphi 0, %s367
      %s370 = sphi 0, %s369
      %s384 = sphi 0, %s370
      %s390 = sphi 0, %s392
      %s393 = sphi 0, %s390
      %s394 = sphi 0, %s393
      %s410 = sphi 0, %s394
      %s416 = sphi 0, %s418
      %s419 = sphi 0, %s416
      %s420 = sphi 0, %s419
      %s436 = sphi 0, %s420
    $region4: #{tpu_custom_call.1} parent=1 // loop_header_branch
      %37 = sbr.rel (%p35) target = $region8
    $region5: #{tpu_custom_call.1} parent=1 // loop_body
      %s39 = ssub.s32 %s34, 1
      %s40 = ssub.s32 %s34, 2
      %s41 = sadd.s32 %s34, 1
      %s43 = sadd.s32 %s42, 1
      %p46 = scmp.eq.s32.totalorder %s34, 1
      %p47 = scmp.ne.s32.totalorder %s42, %s44
      %p48 = scmp.eq.s32.totalorder %s34, 0
      %p49 = por %p47, %p48
      %p50 = scmp.ne.s32.totalorder %s42, %s44
      %p51 = scmp.eq.s32.totalorder %s39, 1
      %p52 = por %p50, %p51
      %p53 = scmp.ne.s32.totalorder %s44, %s45
      %p54 = scmp.eq.s32.totalorder %s39, 0
      %p55 = por %p53, %p54
      %p56 = scmp.ne.s32.totalorder %s44, %s45
      %p57 = scmp.eq.s32.totalorder %s40, 1
      %p58 = por %p56, %p57
      %p60 = scmp.ne.s32.totalorder %s45, %s59
      %p61 = scmp.eq.s32.totalorder %s40, 0
      %p62 = por %p60, %p61
      %s64 = sadd.s32 %s63, 1
      %p67 = scmp.eq.s32.totalorder %s34, 1
      %p68 = scmp.ne.s32.totalorder %s63, %s65
      %p69 = scmp.eq.s32.totalorder %s34, 0
      %p70 = por %p68, %p69
      %p71 = scmp.ne.s32.totalorder %s63, %s65
      %p72 = scmp.eq.s32.totalorder %s39, 1
      %p73 = por %p71, %p72
      %p74 = scmp.ne.s32.totalorder %s65, %s66
      %p75 = scmp.eq.s32.totalorder %s39, 0
      %p76 = por %p74, %p75
      %p77 = scmp.ne.s32.totalorder %s65, %s66
      %p78 = scmp.eq.s32.totalorder %s40, 1
      %p79 = por %p77, %p78
      %p81 = scmp.ne.s32.totalorder %s66, %s80
      %p82 = scmp.eq.s32.totalorder %s40, 0
      %p83 = por %p81, %p82
      %s84 = ssub.s32 %s34, %s41
      %p85 = scmp.eq.s32.totalorder %s84, 0
      %s87 = sadd.s32 %s86, 1
      %s88 = scalar_select %p85, %s86, %s87
      %p91 = pneg %p85
      %p92 = scmp.eq.s32.totalorder %s34, 1
      %p93 = por %p91, %p92
      %p94 = scmp.ne.s32.totalorder %s86, %s89
      %p95 = scmp.eq.s32.totalorder %s34, 0
      %p96 = por %p94, %p95
      %p97 = scmp.ne.s32.totalorder %s86, %s89
      %p98 = scmp.eq.s32.totalorder %s39, 1
      %p99 = por %p97, %p98
      %p100 = scmp.ne.s32.totalorder %s89, %s90
      %p101 = scmp.eq.s32.totalorder %s39, 0
      %p102 = por %p100, %p101
      %p103 = scmp.ne.s32.totalorder %s89, %s90
      %p104 = scmp.eq.s32.totalorder %s40, 1
      %p105 = por %p103, %p104
      %p107 = scmp.ne.s32.totalorder %s90, %s106
      %p108 = scmp.eq.s32.totalorder %s40, 0
      %p109 = por %p107, %p108
      %s110 = ssub.s32 %s34, %s41
      %p111 = scmp.eq.s32.totalorder %s110, 0
      %s113 = sadd.s32 %s112, 1
      %s114 = scalar_select %p111, %s112, %s113
      %p117 = pneg %p111
      %p118 = scmp.eq.s32.totalorder %s34, 1
      %p119 = por %p117, %p118
      %p120 = scmp.ne.s32.totalorder %s112, %s115
      %p121 = scmp.eq.s32.totalorder %s34, 0
      %p122 = por %p120, %p121
      %p123 = scmp.ne.s32.totalorder %s112, %s115
      %p124 = scmp.eq.s32.totalorder %s39, 1
      %p125 = por %p123, %p124
      %p126 = scmp.ne.s32.totalorder %s115, %s116
      %p127 = scmp.eq.s32.totalorder %s39, 0
      %p128 = por %p126, %p127
      %p129 = scmp.ne.s32.totalorder %s115, %s116
      %p130 = scmp.eq.s32.totalorder %s40, 1
      %p131 = por %p129, %p130
      %p133 = scmp.ne.s32.totalorder %s116, %s132
      %p134 = scmp.eq.s32.totalorder %s40, 0
      %p135 = por %p133, %p134
      %s137 = sadd.s32 %s136, 1
      %p140 = scmp.eq.s32.totalorder %s34, 1
      %p141 = scmp.ne.s32.totalorder %s136, %s138
      %p142 = scmp.eq.s32.totalorder %s34, 0
      %p143 = por %p141, %p142
      %p144 = scmp.ne.s32.totalorder %s136, %s138
      %p145 = scmp.eq.s32.totalorder %s39, 1
      %p146 = por %p144, %p145
      %p147 = scmp.ne.s32.totalorder %s138, %s139
      %p148 = scmp.eq.s32.totalorder %s39, 0
      %p149 = por %p147, %p148
      %p150 = scmp.ne.s32.totalorder %s138, %s139
      %p151 = scmp.eq.s32.totalorder %s40, 1
      %p152 = por %p150, %p151
      %p154 = scmp.ne.s32.totalorder %s139, %s153
      %p155 = scmp.eq.s32.totalorder %s40, 0
      %p156 = por %p154, %p155
      %s158 = sadd.s32 %s157, 1
      %p161 = scmp.eq.s32.totalorder %s34, 1
      %p162 = scmp.ne.s32.totalorder %s157, %s159
      %p163 = scmp.eq.s32.totalorder %s34, 0
      %p164 = por %p162, %p163
      %p165 = scmp.ne.s32.totalorder %s157, %s159
      %p166 = scmp.eq.s32.totalorder %s39, 1
      %p167 = por %p165, %p166
      %p168 = scmp.ne.s32.totalorder %s159, %s160
      %p169 = scmp.eq.s32.totalorder %s39, 0
      %p170 = por %p168, %p169
      %p171 = scmp.ne.s32.totalorder %s159, %s160
      %p172 = scmp.eq.s32.totalorder %s40, 1
      %p173 = por %p171, %p172
      %p175 = scmp.ne.s32.totalorder %s160, %s174
      %p176 = scmp.eq.s32.totalorder %s40, 0
      %p177 = por %p175, %p176
      %s179 = sadd.s32 %s178, 1
      %p182 = scmp.eq.s32.totalorder %s34, 1
      %p183 = scmp.ne.s32.totalorder %s178, %s180
      %p184 = scmp.eq.s32.totalorder %s34, 0
      %p185 = por %p183, %p184
      %p186 = scmp.ne.s32.totalorder %s178, %s180
      %p187 = scmp.eq.s32.totalorder %s39, 1
      %p188 = por %p186, %p187
      %p189 = scmp.ne.s32.totalorder %s180, %s181
      %p190 = scmp.eq.s32.totalorder %s39, 0
      %p191 = por %p189, %p190
      %p192 = scmp.ne.s32.totalorder %s180, %s181
      %p193 = scmp.eq.s32.totalorder %s40, 1
      %p194 = por %p192, %p193
      %p196 = scmp.ne.s32.totalorder %s181, %s195
      %p197 = scmp.eq.s32.totalorder %s40, 0
      %p198 = por %p196, %p197
      %s200 = sadd.s32 %s199, 1
      %p203 = scmp.eq.s32.totalorder %s34, 1
      %p204 = scmp.ne.s32.totalorder %s199, %s201
      %p205 = scmp.eq.s32.totalorder %s34, 0
      %p206 = por %p204, %p205
      %p207 = scmp.ne.s32.totalorder %s199, %s201
      %p208 = scmp.eq.s32.totalorder %s39, 1
      %p209 = por %p207, %p208
      %p210 = scmp.ne.s32.totalorder %s201, %s202
      %p211 = scmp.eq.s32.totalorder %s39, 0
      %p212 = por %p210, %p211
      %p213 = scmp.ne.s32.totalorder %s201, %s202
      %p214 = scmp.eq.s32.totalorder %s40, 1
      %p215 = por %p213, %p214
      %p217 = scmp.ne.s32.totalorder %s202, %s216
      %p218 = scmp.eq.s32.totalorder %s40, 0
      %p219 = por %p217, %p218
      %s221 = sadd.s32 %s220, 1
      %p224 = scmp.eq.s32.totalorder %s34, 1
      %p225 = scmp.ne.s32.totalorder %s220, %s222
      %p226 = scmp.eq.s32.totalorder %s34, 0
      %p227 = por %p225, %p226
      %p228 = scmp.ne.s32.totalorder %s220, %s222
      %p229 = scmp.eq.s32.totalorder %s39, 1
      %p230 = por %p228, %p229
      %p231 = scmp.ne.s32.totalorder %s222, %s223
      %p232 = scmp.eq.s32.totalorder %s39, 0
      %p233 = por %p231, %p232
      %p234 = scmp.ne.s32.totalorder %s222, %s223
      %p235 = scmp.eq.s32.totalorder %s40, 1
      %p236 = por %p234, %p235
      %p238 = scmp.ne.s32.totalorder %s223, %s237
      %p239 = scmp.eq.s32.totalorder %s40, 0
      %p240 = por %p238, %p239
      %s242 = sadd.s32 %s241, 1
      %p245 = scmp.eq.s32.totalorder %s34, 1
      %p246 = scmp.ne.s32.totalorder %s241, %s243
      %p247 = scmp.eq.s32.totalorder %s34, 0
      %p248 = por %p246, %p247
      %p249 = scmp.ne.s32.totalorder %s241, %s243
      %p250 = scmp.eq.s32.totalorder %s39, 1
      %p251 = por %p249, %p250
      %p252 = scmp.ne.s32.totalorder %s243, %s244
      %p253 = scmp.eq.s32.totalorder %s39, 0
      %p254 = por %p252, %p253
      %p255 = scmp.ne.s32.totalorder %s243, %s244
      %p256 = scmp.eq.s32.totalorder %s40, 1
      %p257 = por %p255, %p256
      %p259 = scmp.ne.s32.totalorder %s244, %s258
      %p260 = scmp.eq.s32.totalorder %s40, 0
      %p261 = por %p259, %p260
      %s263 = sadd.s32 %s262, 1
      %p266 = scmp.eq.s32.totalorder %s34, 1
      %p267 = scmp.ne.s32.totalorder %s262, %s264
      %p268 = scmp.eq.s32.totalorder %s34, 0
      %p269 = por %p267, %p268
      %p270 = scmp.ne.s32.totalorder %s262, %s264
      %p271 = scmp.eq.s32.totalorder %s39, 1
      %p272 = por %p270, %p271
      %p273 = scmp.ne.s32.totalorder %s264, %s265
      %p274 = scmp.eq.s32.totalorder %s39, 0
      %p275 = por %p273, %p274
      %p276 = scmp.ne.s32.totalorder %s264, %s265
      %p277 = scmp.eq.s32.totalorder %s40, 1
      %p278 = por %p276, %p277
      %p280 = scmp.ne.s32.totalorder %s265, %s279
      %p281 = scmp.eq.s32.totalorder %s40, 0
      %p282 = por %p280, %p281
      %s284 = sadd.s32 %s283, 1
      %p287 = scmp.eq.s32.totalorder %s34, 1
      %p288 = scmp.ne.s32.totalorder %s283, %s285
      %p289 = scmp.eq.s32.totalorder %s34, 0
      %p290 = por %p288, %p289
      %p291 = scmp.ne.s32.totalorder %s283, %s285
      %p292 = scmp.eq.s32.totalorder %s39, 1
      %p293 = por %p291, %p292
      %p294 = scmp.ne.s32.totalorder %s285, %s286
      %p295 = scmp.eq.s32.totalorder %s39, 0
      %p296 = por %p294, %p295
      %p297 = scmp.ne.s32.totalorder %s285, %s286
      %p298 = scmp.eq.s32.totalorder %s40, 1
      %p299 = por %p297, %p298
      %p301 = scmp.ne.s32.totalorder %s286, %s300
      %p302 = scmp.eq.s32.totalorder %s40, 0
      %p303 = por %p301, %p302
      %s305 = sadd.s32 %s304, 1
      %p308 = scmp.eq.s32.totalorder %s34, 1
      %p309 = scmp.ne.s32.totalorder %s304, %s306
      %p310 = scmp.eq.s32.totalorder %s34, 0
      %p311 = por %p309, %p310
      %p312 = scmp.ne.s32.totalorder %s304, %s306
      %p313 = scmp.eq.s32.totalorder %s39, 1
      %p314 = por %p312, %p313
      %p315 = scmp.ne.s32.totalorder %s306, %s307
      %p316 = scmp.eq.s32.totalorder %s39, 0
      %p317 = por %p315, %p316
      %p318 = scmp.ne.s32.totalorder %s306, %s307
      %p319 = scmp.eq.s32.totalorder %s40, 1
      %p320 = por %p318, %p319
      %p322 = scmp.ne.s32.totalorder %s307, %s321
      %p323 = scmp.eq.s32.totalorder %s40, 0
      %p324 = por %p322, %p323
      %s326 = sadd.s32 %s325, 1
      %p329 = scmp.eq.s32.totalorder %s34, 1
      %p330 = scmp.ne.s32.totalorder %s325, %s327
      %p331 = scmp.eq.s32.totalorder %s34, 0
      %p332 = por %p330, %p331
      %p333 = scmp.ne.s32.totalorder %s325, %s327
      %p334 = scmp.eq.s32.totalorder %s39, 1
      %p335 = por %p333, %p334
      %p336 = scmp.ne.s32.totalorder %s327, %s328
      %p337 = scmp.eq.s32.totalorder %s39, 0
      %p338 = por %p336, %p337
      %p339 = scmp.ne.s32.totalorder %s327, %s328
      %p340 = scmp.eq.s32.totalorder %s40, 1
      %p341 = por %p339, %p340
      %p343 = scmp.ne.s32.totalorder %s328, %s342
      %p344 = scmp.eq.s32.totalorder %s40, 0
      %p345 = por %p343, %p344
      %s347 = sadd.s32 %s346, 1
      %p350 = scmp.eq.s32.totalorder %s34, 1
      %p351 = scmp.ne.s32.totalorder %s346, %s348
      %p352 = scmp.eq.s32.totalorder %s34, 0
      %p353 = por %p351, %p352
      %p354 = scmp.ne.s32.totalorder %s346, %s348
      %p355 = scmp.eq.s32.totalorder %s39, 1
      %p356 = por %p354, %p355
      %p357 = scmp.ne.s32.totalorder %s348, %s349
      %p358 = scmp.eq.s32.totalorder %s39, 0
      %p359 = por %p357, %p358
      %p360 = scmp.ne.s32.totalorder %s348, %s349
      %p361 = scmp.eq.s32.totalorder %s40, 1
      %p362 = por %p360, %p361
      %p364 = scmp.ne.s32.totalorder %s349, %s363
      %p365 = scmp.eq.s32.totalorder %s40, 0
      %p366 = por %p364, %p365
      %s368 = sadd.s32 %s367, 1
      %p371 = scmp.eq.s32.totalorder %s34, 1
      %p372 = scmp.ne.s32.totalorder %s367, %s369
      %p373 = scmp.eq.s32.totalorder %s34, 0
      %p374 = por %p372, %p373
      %p375 = scmp.ne.s32.totalorder %s367, %s369
      %p376 = scmp.eq.s32.totalorder %s39, 1
      %p377 = por %p375, %p376
      %p378 = scmp.ne.s32.totalorder %s369, %s370
      %p379 = scmp.eq.s32.totalorder %s39, 0
      %p380 = por %p378, %p379
      %p381 = scmp.ne.s32.totalorder %s369, %s370
      %p382 = scmp.eq.s32.totalorder %s40, 1
      %p383 = por %p381, %p382
      %p385 = scmp.ne.s32.totalorder %s370, %s384
      %p386 = scmp.eq.s32.totalorder %s40, 0
      %p387 = por %p385, %p386
      %s388 = ssub.s32 %s34, %s41
      %p389 = scmp.eq.s32.totalorder %s388, 0
      %s391 = sadd.s32 %s390, 1
      %s392 = scalar_select %p389, %s390, %s391
      %p395 = pneg %p389
      %p396 = scmp.eq.s32.totalorder %s34, 1
      %p397 = por %p395, %p396
      %p398 = scmp.ne.s32.totalorder %s390, %s393
      %p399 = scmp.eq.s32.totalorder %s34, 0
      %p400 = por %p398, %p399
      %p401 = scmp.ne.s32.totalorder %s390, %s393
      %p402 = scmp.eq.s32.totalorder %s39, 1
      %p403 = por %p401, %p402
      %p404 = scmp.ne.s32.totalorder %s393, %s394
      %p405 = scmp.eq.s32.totalorder %s39, 0
      %p406 = por %p404, %p405
      %p407 = scmp.ne.s32.totalorder %s393, %s394
      %p408 = scmp.eq.s32.totalorder %s40, 1
      %p409 = por %p407, %p408
      %p411 = scmp.ne.s32.totalorder %s394, %s410
      %p412 = scmp.eq.s32.totalorder %s40, 0
      %p413 = por %p411, %p412
      %s414 = ssub.s32 %s34, %s41
      %p415 = scmp.eq.s32.totalorder %s414, 0
      %s417 = sadd.s32 %s416, 1
      %s418 = scalar_select %p415, %s416, %s417
      %p421 = pneg %p415
      %p422 = scmp.eq.s32.totalorder %s34, 1
      %p423 = por %p421, %p422
      %p424 = scmp.ne.s32.totalorder %s416, %s419
      %p425 = scmp.eq.s32.totalorder %s34, 0
      %p426 = por %p424, %p425
      %p427 = scmp.ne.s32.totalorder %s416, %s419
      %p428 = scmp.eq.s32.totalorder %s39, 1
      %p429 = por %p427, %p428
      %p430 = scmp.ne.s32.totalorder %s419, %s420
      %p431 = scmp.eq.s32.totalorder %s39, 0
      %p432 = por %p430, %p431
      %p433 = scmp.ne.s32.totalorder %s419, %s420
      %p434 = scmp.eq.s32.totalorder %s40, 1
      %p435 = por %p433, %p434
      %p437 = scmp.ne.s32.totalorder %s420, %s436
      %p438 = scmp.eq.s32.totalorder %s40, 0
      %p439 = por %p437, %p438
      %p440 = scmp.le.s32.totalorder 1, %s34
      %p441 = scmp.lt.s32.totalorder %s34, 3
      %p442 = pnand %p440, %p441
      %p443 = pneg %p442
      // Predicated region
      $region9: #{tpu_custom_call.1} parent=5 // pred_check
        _
      $region10: #{tpu_custom_call.1} parent=5 // pred_check_branch
        %445 = sbr.rel (%p442) target = $region12
      $region11: #{tpu_custom_call.1} parent=5 // pred_region
        %s446 = ssub.s32 %s34, 1
        // Predicated region
        $region13: #{tpu_custom_call.1} parent=11 // pred_check
          %p447 = pneg %p55
        $region14: #{tpu_custom_call.1} parent=11 // pred_check_branch
          %449 = sbr.rel (%p447) target = $region16
        $region15: #{tpu_custom_call.1} parent=11 // pred_region
          %s451 = ssub.s32 16, 16
          %452 = vsyncadd [#allocation6], %s451
          %s454 = sshll.u32 %s0, 4
          %s455 = int_to_ptr.vmem [resolvable:$true] %s454
          %457 = dma.vmem_to_smem %s455, 16, [#allocation2], [#allocation6]
        $region16: #{tpu_custom_call.1} parent=11 // pred_fallthru
          _
        // Predicated region
        $region17: #{tpu_custom_call.1} parent=11 // pred_check
          %p458 = pneg %p76
        $region18: #{tpu_custom_call.1} parent=11 // pred_check_branch
          %460 = sbr.rel (%p458) target = $region20
        $region19: #{tpu_custom_call.1} parent=11 // pred_region
          %s462 = ssub.s32 16, 16
          %463 = vsyncadd [#allocation5], %s462
          %466 = dma.hbm_to_smem %s1, 16, [#allocation7], [#allocation5]
        $region20: #{tpu_custom_call.1} parent=11 // pred_fallthru
          _
        // Predicated region
        $region21: #{tpu_custom_call.1} parent=11 // pred_check
          %p467 = pneg %p149
        $region22: #{tpu_custom_call.1} parent=11 // pred_check_branch
          %469 = sbr.rel (%p467) target = $region24
        $region23: #{tpu_custom_call.1} parent=11 // pred_region
          %s471 = ssub.s32 768, 768
          %472 = vsyncadd [#allocation3], %s471
          %s473 = sshll.u32 [#allocation8], 4
          %s474 = int_to_ptr.vmem [resolvable:$true] %s473
          %479 = dma.hbm_to_vmem [thread:$0]  %s4, 768, %s474, [#allocation3], 64, 64, 4
        $region24: #{tpu_custom_call.1} parent=11 // pred_fallthru
          _
        // Predicated region
        $region25: #{tpu_custom_call.1} parent=11 // pred_check
          %p480 = pneg %p170
        $region26: #{tpu_custom_call.1} parent=11 // pred_check_branch
          %482 = sbr.rel (%p480) target = $region28
        $region27: #{tpu_custom_call.1} parent=11 // pred_region
          _
        $region28: #{tpu_custom_call.1} parent=11 // pred_fallthru
          _
        // Predicated region
        $region29: #{tpu_custom_call.1} parent=11 // pred_check
          %p483 = pneg %p191
        $region30: #{tpu_custom_call.1} parent=11 // pred_check_branch
          %485 = sbr.rel (%p483) target = $region32
        $region31: #{tpu_custom_call.1} parent=11 // pred_region
          _
        $region32: #{tpu_custom_call.1} parent=11 // pred_fallthru
          _
        // Predicated region
        $region33: #{tpu_custom_call.1} parent=11 // pred_check
          %p486 = pneg %p212
        $region34: #{tpu_custom_call.1} parent=11 // pred_check_branch
          %488 = sbr.rel (%p486) target = $region36
        $region35: #{tpu_custom_call.1} parent=11 // pred_region
          _
        $region36: #{tpu_custom_call.1} parent=11 // pred_fallthru
          _
        // Predicated region
        $region37: #{tpu_custom_call.1} parent=11 // pred_check
          %p489 = pneg %p233
        $region38: #{tpu_custom_call.1} parent=11 // pred_check_branch
          %491 = sbr.rel (%p489) target = $region40
        $region39: #{tpu_custom_call.1} parent=11 // pred_region
          %s493 = ssub.s32 2304, 2304
          %494 = vsyncadd [#allocation10], %s493
          %s495 = sshll.u32 [#allocation9], 4
          %s496 = int_to_ptr.vmem [resolvable:$true] %s495
          %501 = dma.hbm_to_vmem [thread:$0]  %s8, 2304, %s496, [#allocation10], 64, 64, 4
        $region40: #{tpu_custom_call.1} parent=11 // pred_fallthru
          _
        // Predicated region
        $region41: #{tpu_custom_call.1} parent=11 // pred_check
          %p502 = pneg %p254
        $region42: #{tpu_custom_call.1} parent=11 // pred_check_branch
          %504 = sbr.rel (%p502) target = $region44
        $region43: #{tpu_custom_call.1} parent=11 // pred_region
          _
        $region44: #{tpu_custom_call.1} parent=11 // pred_fallthru
          _
        // Predicated region
        $region45: #{tpu_custom_call.1} parent=11 // pred_check
          %p505 = pneg %p275
        $region46: #{tpu_custom_call.1} parent=11 // pred_check_branch
          %507 = sbr.rel (%p505) target = $region48
        $region47: #{tpu_custom_call.1} parent=11 // pred_region
          _
        $region48: #{tpu_custom_call.1} parent=11 // pred_fallthru
          _
        // Predicated region
        $region49: #{tpu_custom_call.1} parent=11 // pred_check
          %p508 = pneg %p296
        $region50: #{tpu_custom_call.1} parent=11 // pred_check_branch
          %510 = sbr.rel (%p508) target = $region52
        $region51: #{tpu_custom_call.1} parent=11 // pred_region
          _
        $region52: #{tpu_custom_call.1} parent=11 // pred_fallthru
          _
        // Predicated region
        $region53: #{tpu_custom_call.1} parent=11 // pred_check
          %p511 = pneg %p317
        $region54: #{tpu_custom_call.1} parent=11 // pred_check_branch
          %513 = sbr.rel (%p511) target = $region56
        $region55: #{tpu_custom_call.1} parent=11 // pred_region
          _
        $region56: #{tpu_custom_call.1} parent=11 // pred_fallthru
          _
        // Predicated region
        $region57: #{tpu_custom_call.1} parent=11 // pred_check
          %p514 = pneg %p338
        $region58: #{tpu_custom_call.1} parent=11 // pred_check_branch
          %516 = sbr.rel (%p514) target = $region60
        $region59: #{tpu_custom_call.1} parent=11 // pred_region
          _
        $region60: #{tpu_custom_call.1} parent=11 // pred_fallthru
          _
        // Predicated region
        $region61: #{tpu_custom_call.1} parent=11 // pred_check
          %p517 = pneg %p359
        $region62: #{tpu_custom_call.1} parent=11 // pred_check_branch
          %519 = sbr.rel (%p517) target = $region64
        $region63: #{tpu_custom_call.1} parent=11 // pred_region
          _
        $region64: #{tpu_custom_call.1} parent=11 // pred_fallthru
          _
        // Predicated region
        $region65: #{tpu_custom_call.1} parent=11 // pred_check
          %p520 = pneg %p380
        $region66: #{tpu_custom_call.1} parent=11 // pred_check_branch
          %522 = sbr.rel (%p520) target = $region68
        $region67: #{tpu_custom_call.1} parent=11 // pred_region
          _
        $region68: #{tpu_custom_call.1} parent=11 // pred_fallthru
          _
      $region12: #{tpu_custom_call.1} parent=5 // pred_fallthru
        _
      %p523 = scmp.lt.s32.totalorder %s34, 2
      // Predicated region
      $region69: #{tpu_custom_call.1} parent=5 // pred_check
        %p524 = pneg %p523
      $region70: #{tpu_custom_call.1} parent=5 // pred_check_branch
        %526 = sbr.rel (%p524) target = $region72
      $region71: #{tpu_custom_call.1} parent=5 // pred_region
        // Predicated region
        $region73: #{tpu_custom_call.1} parent=71 // pred_check
          %p527 = pneg %p96
        $region74: #{tpu_custom_call.1} parent=71 // pred_check_branch
          %529 = sbr.rel (%p527) target = $region76
        $region75: #{tpu_custom_call.1} parent=71 // pred_region
          %p530 = scmp.lt.s32.totalorder %s34, 1
          %s531 = scalar_select %p530, %s34, 1
          %s532 = smul.addr %s531, 8
          %s533 = scalar_lea.vmem %s2, %s532
        $region76: #{tpu_custom_call.1} parent=71 // pred_fallthru
          _
        // Predicated region
        $region77: #{tpu_custom_call.1} parent=71 // pred_check
          %p534 = pneg %p122
        $region78: #{tpu_custom_call.1} parent=71 // pred_check_branch
          %536 = sbr.rel (%p534) target = $region80
        $region79: #{tpu_custom_call.1} parent=71 // pred_region
          %p537 = scmp.lt.s32.totalorder %s34, 1
          %s538 = scalar_select %p537, %s34, 1
          %s539 = smul.addr %s538, 8
          %s540 = scalar_lea.vmem %s3, %s539
        $region80: #{tpu_custom_call.1} parent=71 // pred_fallthru
          _
      $region72: #{tpu_custom_call.1} parent=5 // pred_fallthru
        _
      %p541 = scmp.le.s32.totalorder 1, %s34
      %p542 = scmp.lt.s32.totalorder %s34, 3
      %p543 = pnand %p541, %p542
      %p544 = pneg %p543
      // Predicated region
      $region81: #{tpu_custom_call.1} parent=5 // pred_check
        _
      $region82: #{tpu_custom_call.1} parent=5 // pred_check_branch
        %546 = sbr.rel (%p543) target = $region84
      $region83: #{tpu_custom_call.1} parent=5 // pred_region
        %s547 = ssub.s32 %s34, 1
        // Predicated region
        $region85: #{tpu_custom_call.1} parent=83 // pred_check
          %p548 = pneg %p55
        $region86: #{tpu_custom_call.1} parent=83 // pred_check_branch
          %550 = sbr.rel (%p548) target = $region88
        $region87: #{tpu_custom_call.1} parent=83 // pred_region
          %551 = dma.done [#allocation6], 16
        $region88: #{tpu_custom_call.1} parent=83 // pred_fallthru
          _
        // Predicated region
        $region89: #{tpu_custom_call.1} parent=83 // pred_check
          %p552 = pneg %p76
        $region90: #{tpu_custom_call.1} parent=83 // pred_check_branch
          %554 = sbr.rel (%p552) target = $region92
        $region91: #{tpu_custom_call.1} parent=83 // pred_region
          %555 = dma.done [#allocation5], 16
        $region92: #{tpu_custom_call.1} parent=83 // pred_fallthru
          _
        // Predicated region
        $region93: #{tpu_custom_call.1} parent=83 // pred_check
          %p556 = pneg %p149
        $region94: #{tpu_custom_call.1} parent=83 // pred_check_branch
          %558 = sbr.rel (%p556) target = $region96
        $region95: #{tpu_custom_call.1} parent=83 // pred_region
          %559 = dma.done [#allocation3], 768
        $region96: #{tpu_custom_call.1} parent=83 // pred_fallthru
          _
        // Predicated region
        $region97: #{tpu_custom_call.1} parent=83 // pred_check
          %p560 = pneg %p233
        $region98: #{tpu_custom_call.1} parent=83 // pred_check_branch
          %562 = sbr.rel (%p560) target = $region100
        $region99: #{tpu_custom_call.1} parent=83 // pred_region
          %563 = dma.done [#allocation10], 2304
        $region100: #{tpu_custom_call.1} parent=83 // pred_fallthru
          _
        %564 = sfence
        %p565 = pneg %p55
        %p566 = pneg %p52
        %p567 = pneg %p76
        %p568 = pneg %p73
        %p569 = scmp.lt.s32.totalorder %s39, 1
        %s570 = scalar_select %p569, %s39, 1
        %s571 = smul.addr %s570, 8
        %s572 = scalar_lea.vmem %s2, %s571
        %p573 = pneg %p102
        %p574 = pneg %p99
        %p575 = scmp.lt.s32.totalorder %s39, 1
        %s576 = scalar_select %p575, %s39, 1
        %s577 = smul.addr %s576, 8
        %s578 = scalar_lea.vmem %s3, %s577
        %p579 = pneg %p128
        %p580 = pneg %p125
        %p581 = pneg %p149
        %p582 = pneg %p146
        %p583 = pneg %p170
        %p584 = pneg %p167
        %p585 = pneg %p191
        %p586 = pneg %p188
        %p587 = pneg %p212
        %p588 = pneg %p209
        %p589 = pneg %p233
        %p590 = pneg %p230
        %p591 = pneg %p254
        %p592 = pneg %p251
        %p593 = pneg %p275
        %p594 = pneg %p272
        %p595 = pneg %p296
        %p596 = pneg %p293
        %p597 = pneg %p317
        %p598 = pneg %p314
        %p599 = pneg %p338
        %p600 = pneg %p335
        %p601 = pneg %p359
        %p602 = pneg %p356
        %p603 = pneg %p380
        %p604 = pneg %p377
        %p605 = pneg %p406
        %p606 = pneg %p403
        %s607 = sand.u32 %s393, 1
        %s608 = scalar_lea.sflag [#allocation4], %s607
        %s609 = sand.u32 %s393, 1
        %s610 = smul.addr %s609, 8
        %s611 = scalar_lea.vmem [#allocation11], %s610
        %p612 = pneg %p432
        %p613 = pneg %p429
        %s614 = sand.u32 %s419, 1
        %s615 = scalar_lea.sflag [#allocation13], %s614
        %s616 = sand.u32 %s419, 1
        %s617 = smul.addr %s616, 4
        %s618 = scalar_lea.vmem [#allocation12], %s617
        %p619 = scmp.lt.s32.totalorder %s39, 1
        %s620 = scalar_select %p619, %s39, 1
        %s621 = smul.addr %s620, 8
        %s622 = scalar_lea.vmem %s2, %s621
        %p623 = scmp.lt.s32.totalorder %s39, 1
        %s624 = scalar_select %p623, %s39, 1
        %s625 = smul.addr %s624, 8
        %s626 = scalar_lea.vmem %s3, %s625
        %v628 = vld [vmem:[%s622] sm:$0xff]
        %v629 = vld [vmem:[%s626] sm:$0xff]
        %v630 = vld [vmem:[%s5] sm:$0x1]
        %632 = vset.pattern.permute.xlu0 0
        %633 = vperm.xlu0 %632, %v629
        %v634 = vpop.permute.xlu0 %633
        %v636 = vmul.f32 %v628, %v634
        %v637 = vld [vmem:[#allocation8] sm:$0xf]
        %v638 = vld [vmem:[#allocation8 + $0x4] sm:$0xf]
        %v639 = vld [vmem:[#allocation8 + $0x8] sm:$0xf]
        %v640 = vld [vmem:[#allocation8 + $0xc] sm:$0xf]
        %v641 = vld [vmem:[#allocation8 + $0x10] sm:$0xf]
        %v642 = vld [vmem:[#allocation8 + $0x14] sm:$0xf]
        %v643 = vld [vmem:[#allocation8 + $0x18] sm:$0xf]
        %v644 = vld [vmem:[#allocation8 + $0x1c] sm:$0xf]
        %v645 = vld [vmem:[#allocation8 + $0x20] sm:$0xf]
        %v646 = vld [vmem:[#allocation8 + $0x24] sm:$0xf]
        %v647 = vld [vmem:[#allocation8 + $0x28] sm:$0xf]
        %v648 = vld [vmem:[#allocation8 + $0x2c] sm:$0xf]
        %v650 = vrot.slane %v636, 7
        %vm652 = vcmask 1040384
        %v653 = vsel %vm652, 0.0, %v650
        %v654 = vsel %vm652, %v650, 0.0
        %v655 = vpack.c.bf16 %v654, %v653
        %v657 = vlaneseq
        %v658 = vshrl.u32 %v657, 7
        %v659 = vsub.s32 0, %v658
        %v660 = vrot.slane %v630, %v659
        %v663 = vshrl.u32 %v655, 16
        %v665 = vshll.u32 %v655, 16
        %v667 = vrot.slane %v665, 1
        %v668 = vor.u32 %v663, %v667
        %v673 = vunpack.c.l.b16 %v641
        %v674 = vunpack.c.l.b16 %v642
        %v675 = vunpack.c.l.b16 %v643
        %v676 = vunpack.c.l.b16 %v644
        %v677 = vpack.c.b16 %v674, %v673
        %v678 = vpack.c.b16 %v676, %v675
        %vm681 = vcmask 261120
        %v683 = vsel %vm681, %v668, 0
        %685 = vmatprep.subr.bf16.mxu0 0
        %686 = vmatpush1.bf16.msra.mxu0 %v677
        %687 = vmatprep.subr.bf16.mxu0 0
        %688 = vmatpush1.bf16.msra.mxu0 %v678
        %689 = vmatprep.subr.bf16.mxu0 0
        %690 = vmatpush1.bf16.msra.mxu0 0
        %691 = vmatprep.subr.bf16.mxu0 0
        %692 = vmatpush1.bf16.msra.mxu0 0
        %693 = vmatprep.subr.bf16.mxu0 0
        %694 = vmatpush1.bf16.msra.mxu0 0
        %695 = vmatprep.subr.bf16.mxu0 0
        %696 = vmatpush1.bf16.msra.mxu0 0
        %697 = vmatprep.subr.bf16.mxu0 0
        %698 = vmatpush1.bf16.msra.mxu0 0
        %699 = vmatprep.subr.bf16.mxu0 0
        %700 = vmatpush1.bf16.msra.mxu0 0
        %701 = vmatprep.subr.bf16.mxu0 0
        %702 = vmatpush1.bf16.msra.mxu0 0
        %703 = vmatprep.subr.bf16.mxu0 0
        %704 = vmatpush1.bf16.msra.mxu0 0
        %705 = vmatprep.subr.bf16.mxu0 0
        %706 = vmatpush1.bf16.msra.mxu0 0
        %707 = vmatprep.subr.bf16.mxu0 0
        %708 = vmatpush1.bf16.msra.mxu0 0
        %709 = vmatprep.subr.bf16.mxu0 0
        %710 = vmatpush1.bf16.msra.mxu0 0
        %711 = vmatprep.subr.bf16.mxu0 0
        %712 = vmatpush1.bf16.msra.mxu0 0
        %713 = vmatprep.subr.bf16.mxu0 0
        %714 = vmatpush1.bf16.msra.mxu0 0
        %715 = vmatprep.subr.bf16.mxu0 0
        %716 = vmatpush1.bf16.msra.mxu0 0
        %717 = vmatprep.mubr.bf16.mxu0 0
        %718 = vmatmul.mubr.bf16.gmra.mrb[0].mxu0 %v683
        %v719 = vpop.f32.mrb[0].mxu0
        %v720 = vadd.f32 %v660, %v719
        %v721 = vpop.f32.mrb[0].mxu0
        %v722 = vpop.f32.mrb[0].mxu0
        %v723 = vpop.f32.mrb[0].mxu0
        %724 = vdwg.mxu0
        %v725 = vpack.c.bf16 %v653, %v653
        %v730 = vunpack.c.l.b16 %v637
        %v731 = vunpack.c.l.b16 %v638
        %v732 = vunpack.c.l.b16 %v639
        %v733 = vunpack.c.l.b16 %v640
        %v734 = vpack.c.b16 %v731, %v730
        %v735 = vpack.c.b16 %v733, %v732
        %v739 = vsel %vm681, %v725, 0
        %741 = vmatprep.subr.bf16.mxu0 0
        %742 = vmatpush1.bf16.msra.mxu0 %v734
        %743 = vmatprep.subr.bf16.mxu0 0
        %744 = vmatpush1.bf16.msra.mxu0 %v735
        %745 = vmatprep.subr.bf16.mxu0 0
        %746 = vmatpush1.bf16.msra.mxu0 0
        %747 = vmatprep.subr.bf16.mxu0 0
        %748 = vmatpush1.bf16.msra.mxu0 0
        %749 = vmatprep.subr.bf16.mxu0 0
        %750 = vmatpush1.bf16.msra.mxu0 0
        %751 = vmatprep.subr.bf16.mxu0 0
        %752 = vmatpush1.bf16.msra.mxu0 0
        %753 = vmatprep.subr.bf16.mxu0 0
        %754 = vmatpush1.bf16.msra.mxu0 0
        %755 = vmatprep.subr.bf16.mxu0 0
        %756 = vmatpush1.bf16.msra.mxu0 0
        %757 = vmatprep.subr.bf16.mxu0 0
        %758 = vmatpush1.bf16.msra.mxu0 0
        %759 = vmatprep.subr.bf16.mxu0 0
        %760 = vmatpush1.bf16.msra.mxu0 0
        %761 = vmatprep.subr.bf16.mxu0 0
        %762 = vmatpush1.bf16.msra.mxu0 0
        %763 = vmatprep.subr.bf16.mxu0 0
        %764 = vmatpush1.bf16.msra.mxu0 0
        %765 = vmatprep.subr.bf16.mxu0 0
        %766 = vmatpush1.bf16.msra.mxu0 0
        %767 = vmatprep.subr.bf16.mxu0 0
        %768 = vmatpush1.bf16.msra.mxu0 0
        %769 = vmatprep.subr.bf16.mxu0 0
        %770 = vmatpush1.bf16.msra.mxu0 0
        %771 = vmatprep.subr.bf16.mxu0 0
        %772 = vmatpush1.bf16.msra.mxu0 0
        %773 = vmatprep.mubr.bf16.mxu0 0
        %774 = vmatmul.mubr.bf16.gmra.mrb[0].mxu0 %v739
        %v775 = vpop.f32.mrb[0].mxu0
        %v776 = vadd.f32 0.0, %v775
        %v777 = vpop.f32.mrb[0].mxu0
        %v778 = vpop.f32.mrb[0].mxu0
        %v779 = vpop.f32.mrb[0].mxu0
        %780 = vdwg.mxu0
        %v781 = vadd.f32 %v720, %v776
        %v783 = vrot.slane %v655, 1
        %v788 = vunpack.c.l.b16 %v645
        %v789 = vunpack.c.l.b16 %v646
        %v790 = vunpack.c.l.b16 %v647
        %v791 = vunpack.c.l.b16 %v648
        %v792 = vpack.c.b16 %v789, %v788
        %v793 = vpack.c.b16 %v791, %v790
        %v797 = vsel %vm681, %v783, 0
        %799 = vmatprep.subr.bf16.mxu0 0
        %800 = vmatpush1.bf16.msra.mxu0 %v792
        %801 = vmatprep.subr.bf16.mxu0 0
        %802 = vmatpush1.bf16.msra.mxu0 %v793
        %803 = vmatprep.subr.bf16.mxu0 0
        %804 = vmatpush1.bf16.msra.mxu0 0
        %805 = vmatprep.subr.bf16.mxu0 0
        %806 = vmatpush1.bf16.msra.mxu0 0
        %807 = vmatprep.subr.bf16.mxu0 0
        %808 = vmatpush1.bf16.msra.mxu0 0
        %809 = vmatprep.subr.bf16.mxu0 0
        %810 = vmatpush1.bf16.msra.mxu0 0
        %811 = vmatprep.subr.bf16.mxu0 0
        %812 = vmatpush1.bf16.msra.mxu0 0
        %813 = vmatprep.subr.bf16.mxu0 0
        %814 = vmatpush1.bf16.msra.mxu0 0
        %815 = vmatprep.subr.bf16.mxu0 0
        %816 = vmatpush1.bf16.msra.mxu0 0
        %817 = vmatprep.subr.bf16.mxu0 0
        %818 = vmatpush1.bf16.msra.mxu0 0
        %819 = vmatprep.subr.bf16.mxu0 0
        %820 = vmatpush1.bf16.msra.mxu0 0
        %821 = vmatprep.subr.bf16.mxu0 0
        %822 = vmatpush1.bf16.msra.mxu0 0
        %823 = vmatprep.subr.bf16.mxu0 0
        %824 = vmatpush1.bf16.msra.mxu0 0
        %825 = vmatprep.subr.bf16.mxu0 0
        %826 = vmatpush1.bf16.msra.mxu0 0
        %827 = vmatprep.subr.bf16.mxu0 0
        %828 = vmatpush1.bf16.msra.mxu0 0
        %829 = vmatprep.subr.bf16.mxu0 0
        %830 = vmatpush1.bf16.msra.mxu0 0
        %831 = vmatprep.mubr.bf16.mxu0 0
        %832 = vmatmul.mubr.bf16.gmra.mrb[0].mxu0 %v797
        %v833 = vpop.f32.mrb[0].mxu0
        %v834 = vadd.f32 0.0, %v833
        %v835 = vpop.f32.mrb[0].mxu0
        %v836 = vpop.f32.mrb[0].mxu0
        %v837 = vpop.f32.mrb[0].mxu0
        %838 = vdwg.mxu0
        %v839 = vadd.f32 %v781, %v834
        %v840 = vmax.f32 %v839, 0.0
        %v841 = vld [vmem:[%s6] sm:$0x1]
        %v842 = vld [vmem:[%s7] sm:$0x1]
        %v843 = vsel %vm681, %v840, 0.0
        %844 = vadd.xlane.f32.xlu0 %v843
        %v845 = vpop.xlane.xlu0 %844
        %v846 = vrcp.pop 32.0
        %v847 = vmul.f32 %v845, %v846
        %v848 = vmul.f32 %v840, %v840
        %v849 = vsel %vm681, %v848, 0.0
        %850 = vadd.xlane.f32.xlu0 %v849
        %v851 = vpop.xlane.xlu0 %850
        %v852 = vmul.f32 %v851, %v846
        %v853 = vmul.f32 %v847, %v847
        %v854 = vsub.f32 %v852, %v853
        %v855 = vsub.f32 %v840, %v847
        %v856 = vadd.f32 %v854, 1e-05
        %v857 = vrsqrt.pop %v856
        %v858 = vmul.f32 %v855, %v857
        %860 = vrot.lane.b32.xlu0 %v840, 96
        %v861 = vpop.permute.xlu0 %860
        %v863 = vsel %vm681, %v861, 0.0
        %864 = vadd.xlane.f32.xlu0 %v863
        %v865 = vpop.xlane.xlu0 %864
        %v866 = vmul.f32 %v865, %v846
        %868 = vrot.lane.b32.xlu0 %v848, 96
        %v869 = vpop.permute.xlu0 %868
        %v871 = vsel %vm681, %v869, 0.0
        %872 = vadd.xlane.f32.xlu0 %v871
        %v873 = vpop.xlane.xlu0 %872
        %v874 = vmul.f32 %v873, %v846
        %v875 = vmul.f32 %v866, %v866
        %v876 = vsub.f32 %v874, %v875
        %v877 = vsub.f32 %v840, %v866
        %v878 = vadd.f32 %v876, 1e-05
        %v879 = vrsqrt.pop %v878
        %v880 = vmul.f32 %v877, %v879
        %881 = vrot.lane.b32.xlu0 %v840, 64
        %v882 = vpop.permute.xlu0 %881
        %v884 = vsel %vm681, %v882, 0.0
        %885 = vadd.xlane.f32.xlu0 %v884
        %v886 = vpop.xlane.xlu0 %885
        %v887 = vmul.f32 %v886, %v846
        %888 = vrot.lane.b32.xlu0 %v848, 64
        %v889 = vpop.permute.xlu0 %888
        %v891 = vsel %vm681, %v889, 0.0
        %892 = vadd.xlane.f32.xlu0 %v891
        %v893 = vpop.xlane.xlu0 %892
        %v894 = vmul.f32 %v893, %v846
        %v895 = vmul.f32 %v887, %v887
        %v896 = vsub.f32 %v894, %v895
        %v897 = vsub.f32 %v840, %v887
        %v898 = vadd.f32 %v896, 1e-05
        %v899 = vrsqrt.pop %v898
        %v900 = vmul.f32 %v897, %v899
        %v901 = vsel %vm681, %v858, %v880
        %vm902 = vcmask 523264
        %v903 = vsel %vm902, %v901, %v900
        %v905 = vlaneseq
        %v906 = vshrl.u32 %v905, 7
        %v907 = vsub.s32 0, %v906
        %v908 = vrot.slane %v841, %v907
        %v910 = vmul.f32 %v903, %v908
        %v912 = vlaneseq
        %v913 = vshrl.u32 %v912, 7
        %v914 = vsub.s32 0, %v913
        %v915 = vrot.slane %v842, %v914
        %v917 = vadd.f32 %v910, %v915
        %v918 = vmul.f32 %v917, %v634
        %v919 = vld [vmem:[#allocation9] sm:$0xf]
        %v920 = vld [vmem:[#allocation9 + $0x4] sm:$0xf]
        %v921 = vld [vmem:[#allocation9 + $0x8] sm:$0xf]
        %v922 = vld [vmem:[#allocation9 + $0xc] sm:$0xf]
        %v923 = vld [vmem:[#allocation9 + $0x10] sm:$0xf]
        %v924 = vld [vmem:[#allocation9 + $0x14] sm:$0xf]
        %v925 = vld [vmem:[#allocation9 + $0x18] sm:$0xf]
        %v926 = vld [vmem:[#allocation9 + $0x1c] sm:$0xf]
        %v927 = vld [vmem:[#allocation9 + $0x20] sm:$0xf]
        %v928 = vld [vmem:[#allocation9 + $0x24] sm:$0xf]
        %v929 = vld [vmem:[#allocation9 + $0x28] sm:$0xf]
        %v930 = vld [vmem:[#allocation9 + $0x2c] sm:$0xf]
        %v931 = vld [vmem:[#allocation9 + $0x30] sm:$0xf]
        %v932 = vld [vmem:[#allocation9 + $0x34] sm:$0xf]
        %v933 = vld [vmem:[#allocation9 + $0x38] sm:$0xf]
        %v934 = vld [vmem:[#allocation9 + $0x3c] sm:$0xf]
        %v935 = vld [vmem:[#allocation9 + $0x40] sm:$0xf]
        %v936 = vld [vmem:[#allocation9 + $0x44] sm:$0xf]
        %v937 = vld [vmem:[#allocation9 + $0x48] sm:$0xf]
        %v938 = vld [vmem:[#allocation9 + $0x4c] sm:$0xf]
        %v939 = vld [vmem:[#allocation9 + $0x50] sm:$0xf]
        %v940 = vld [vmem:[#allocation9 + $0x54] sm:$0xf]
        %v941 = vld [vmem:[#allocation9 + $0x58] sm:$0xf]
        %v942 = vld [vmem:[#allocation9 + $0x5c] sm:$0xf]
        %v943 = vld [vmem:[#allocation9 + $0x60] sm:$0xf]
        %v944 = vld [vmem:[#allocation9 + $0x64] sm:$0xf]
        %v945 = vld [vmem:[#allocation9 + $0x68] sm:$0xf]
        %v946 = vld [vmem:[#allocation9 + $0x6c] sm:$0xf]
        %v947 = vld [vmem:[#allocation9 + $0x70] sm:$0xf]
        %v948 = vld [vmem:[#allocation9 + $0x74] sm:$0xf]
        %v949 = vld [vmem:[#allocation9 + $0x78] sm:$0xf]
        %v950 = vld [vmem:[#allocation9 + $0x7c] sm:$0xf]
        %v951 = vld [vmem:[#allocation9 + $0x80] sm:$0xf]
        %v952 = vld [vmem:[#allocation9 + $0x84] sm:$0xf]
        %v953 = vld [vmem:[#allocation9 + $0x88] sm:$0xf]
        %v954 = vld [vmem:[#allocation9 + $0x8c] sm:$0xf]
        %v955 = vld [vmem:[%s9] sm:$0x1]
        %v957 = vrot.slane %v918, 7
        %v959 = vsel %vm652, 0.0, %v957
        %v960 = vsel %vm652, %v957, 0.0
        %v961 = vpack.c.bf16 %v960, %v959
        %v963 = vlaneseq
        %v964 = vshrl.u32 %v963, 7
        %v965 = vsub.s32 0, %v964
        %v966 = vrot.slane %v955, %v965
        %v969 = vshrl.u32 %v961, 16
        %v971 = vshll.u32 %v961, 16
        %v973 = vrot.slane %v971, 1
        %v974 = vor.u32 %v969, %v973
        %v979 = vunpack.c.l.b16 %v923
        %v980 = vunpack.c.l.b16 %v924
        %v981 = vunpack.c.l.b16 %v925
        %v982 = vunpack.c.l.b16 %v926
        %v983 = vpack.c.b16 %v980, %v979
        %v984 = vpack.c.b16 %v982, %v981
        %v988 = vsel %vm681, %v974, 0
        %990 = vmatprep.subr.bf16.mxu0 0
        %991 = vmatpush1.bf16.msra.mxu0 %v983
        %992 = vmatprep.subr.bf16.mxu0 0
        %993 = vmatpush1.bf16.msra.mxu0 %v984
        %994 = vmatprep.subr.bf16.mxu0 0
        %995 = vmatpush1.bf16.msra.mxu0 0
        %996 = vmatprep.subr.bf16.mxu0 0
        %997 = vmatpush1.bf16.msra.mxu0 0
        %998 = vmatprep.subr.bf16.mxu0 0
        %999 = vmatpush1.bf16.msra.mxu0 0
        %1000 = vmatprep.subr.bf16.mxu0 0
        %1001 = vmatpush1.bf16.msra.mxu0 0
        %1002 = vmatprep.subr.bf16.mxu0 0
        %1003 = vmatpush1.bf16.msra.mxu0 0
        %1004 = vmatprep.subr.bf16.mxu0 0
        %1005 = vmatpush1.bf16.msra.mxu0 0
        %1006 = vmatprep.subr.bf16.mxu0 0
        %1007 = vmatpush1.bf16.msra.mxu0 0
        %1008 = vmatprep.subr.bf16.mxu0 0
        %1009 = vmatpush1.bf16.msra.mxu0 0
        %1010 = vmatprep.subr.bf16.mxu0 0
        %1011 = vmatpush1.bf16.msra.mxu0 0
        %1012 = vmatprep.subr.bf16.mxu0 0
        %1013 = vmatpush1.bf16.msra.mxu0 0
        %1014 = vmatprep.subr.bf16.mxu0 0
        %1015 = vmatpush1.bf16.msra.mxu0 0
        %1016 = vmatprep.subr.bf16.mxu0 0
        %1017 = vmatpush1.bf16.msra.mxu0 0
        %1018 = vmatprep.subr.bf16.mxu0 0
        %1019 = vmatpush1.bf16.msra.mxu0 0
        %1020 = vmatprep.subr.bf16.mxu0 0
        %1021 = vmatpush1.bf16.msra.mxu0 0
        %1022 = vmatprep.mubr.bf16.mxu0 0
        %1023 = vmatmul.mubr.bf16.gmra.mrb[0].mxu0 %v988
        %v1024 = vpop.f32.mrb[0].mxu0
        %v1025 = vadd.f32 %v966, %v1024
        %v1026 = vpop.f32.mrb[0].mxu0
        %v1027 = vpop.f32.mrb[0].mxu0
        %v1028 = vpop.f32.mrb[0].mxu0
        %1029 = vdwg.mxu0
        %v1030 = vpack.c.bf16 %v959, %v959
        %v1035 = vunpack.c.l.b16 %v919
        %v1036 = vunpack.c.l.b16 %v920
        %v1037 = vunpack.c.l.b16 %v921
        %v1038 = vunpack.c.l.b16 %v922
        %v1039 = vpack.c.b16 %v1036, %v1035
        %v1040 = vpack.c.b16 %v1038, %v1037
        %v1044 = vsel %vm681, %v1030, 0
        %1046 = vmatprep.subr.bf16.mxu0 0
        %1047 = vmatpush1.bf16.msra.mxu0 %v1039
        %1048 = vmatprep.subr.bf16.mxu0 0
        %1049 = vmatpush1.bf16.msra.mxu0 %v1040
        %1050 = vmatprep.subr.bf16.mxu0 0
        %1051 = vmatpush1.bf16.msra.mxu0 0
        %1052 = vmatprep.subr.bf16.mxu0 0
        %1053 = vmatpush1.bf16.msra.mxu0 0
        %1054 = vmatprep.subr.bf16.mxu0 0
        %1055 = vmatpush1.bf16.msra.mxu0 0
        %1056 = vmatprep.subr.bf16.mxu0 0
        %1057 = vmatpush1.bf16.msra.mxu0 0
        %1058 = vmatprep.subr.bf16.mxu0 0
        %1059 = vmatpush1.bf16.msra.mxu0 0
        %1060 = vmatprep.subr.bf16.mxu0 0
        %1061 = vmatpush1.bf16.msra.mxu0 0
        %1062 = vmatprep.subr.bf16.mxu0 0
        %1063 = vmatpush1.bf16.msra.mxu0 0
        %1064 = vmatprep.subr.bf16.mxu0 0
        %1065 = vmatpush1.bf16.msra.mxu0 0
        %1066 = vmatprep.subr.bf16.mxu0 0
        %1067 = vmatpush1.bf16.msra.mxu0 0
        %1068 = vmatprep.subr.bf16.mxu0 0
        %1069 = vmatpush1.bf16.msra.mxu0 0
        %1070 = vmatprep.subr.bf16.mxu0 0
        %1071 = vmatpush1.bf16.msra.mxu0 0
        %1072 = vmatprep.subr.bf16.mxu0 0
        %1073 = vmatpush1.bf16.msra.mxu0 0
        %1074 = vmatprep.subr.bf16.mxu0 0
        %1075 = vmatpush1.bf16.msra.mxu0 0
        %1076 = vmatprep.subr.bf16.mxu0 0
        %1077 = vmatpush1.bf16.msra.mxu0 0
        %1078 = vmatprep.mubr.bf16.mxu0 0
        %1079 = vmatmul.mubr.bf16.gmra.mrb[0].mxu0 %v1044
        %v1080 = vpop.f32.mrb[0].mxu0
        %v1081 = vadd.f32 0.0, %v1080
        %v1082 = vpop.f32.mrb[0].mxu0
        %v1083 = vpop.f32.mrb[0].mxu0
        %v1084 = vpop.f32.mrb[0].mxu0
        %1085 = vdwg.mxu0
        %v1086 = vadd.f32 %v1025, %v1081
        %v1088 = vrot.slane %v961, 1
        %v1093 = vunpack.c.l.b16 %v927
        %v1094 = vunpack.c.l.b16 %v928
        %v1095 = vunpack.c.l.b16 %v929
        %v1096 = vunpack.c.l.b16 %v930
        %v1097 = vpack.c.b16 %v1094, %v1093
        %v1098 = vpack.c.b16 %v1096, %v1095
        %v1102 = vsel %vm681, %v1088, 0
        %1104 = vmatprep.subr.bf16.mxu0 0
        %1105 = vmatpush1.bf16.msra.mxu0 %v1097
        %1106 = vmatprep.subr.bf16.mxu0 0
        %1107 = vmatpush1.bf16.msra.mxu0 %v1098
        %1108 = vmatprep.subr.bf16.mxu0 0
        %1109 = vmatpush1.bf16.msra.mxu0 0
        %1110 = vmatprep.subr.bf16.mxu0 0
        %1111 = vmatpush1.bf16.msra.mxu0 0
        %1112 = vmatprep.subr.bf16.mxu0 0
        %1113 = vmatpush1.bf16.msra.mxu0 0
        %1114 = vmatprep.subr.bf16.mxu0 0
        %1115 = vmatpush1.bf16.msra.mxu0 0
        %1116 = vmatprep.subr.bf16.mxu0 0
        %1117 = vmatpush1.bf16.msra.mxu0 0
        %1118 = vmatprep.subr.bf16.mxu0 0
        %1119 = vmatpush1.bf16.msra.mxu0 0
        %1120 = vmatprep.subr.bf16.mxu0 0
        %1121 = vmatpush1.bf16.msra.mxu0 0
        %1122 = vmatprep.subr.bf16.mxu0 0
        %1123 = vmatpush1.bf16.msra.mxu0 0
        %1124 = vmatprep.subr.bf16.mxu0 0
        %1125 = vmatpush1.bf16.msra.mxu0 0
        %1126 = vmatprep.subr.bf16.mxu0 0
        %1127 = vmatpush1.bf16.msra.mxu0 0
        %1128 = vmatprep.subr.bf16.mxu0 0
        %1129 = vmatpush1.bf16.msra.mxu0 0
        %1130 = vmatprep.subr.bf16.mxu0 0
        %1131 = vmatpush1.bf16.msra.mxu0 0
        %1132 = vmatprep.subr.bf16.mxu0 0
        %1133 = vmatpush1.bf16.msra.mxu0 0
        %1134 = vmatprep.subr.bf16.mxu0 0
        %1135 = vmatpush1.bf16.msra.mxu0 0
        %1136 = vmatprep.mubr.bf16.mxu0 0
        %1137 = vmatmul.mubr.bf16.gmra.mrb[0].mxu0 %v1102
        %v1138 = vpop.f32.mrb[0].mxu0
        %v1139 = vadd.f32 0.0, %v1138
        %v1140 = vpop.f32.mrb[0].mxu0
        %v1141 = vpop.f32.mrb[0].mxu0
        %v1142 = vpop.f32.mrb[0].mxu0
        %1143 = vdwg.mxu0
        %v1144 = vadd.f32 %v1086, %v1139
        %1145 = vrot.lane.b32.xlu0 %v974, 96
        %v1146 = vpop.permute.xlu0 %1145
        %v1151 = vunpack.c.l.b16 %v935
        %v1152 = vunpack.c.l.b16 %v936
        %v1153 = vunpack.c.l.b16 %v937
        %v1154 = vunpack.c.l.b16 %v938
        %v1155 = vpack.c.b16 %v1152, %v1151
        %v1156 = vpack.c.b16 %v1154, %v1153
        %1159 = vrot.lane.b32.xlu0 %v966, 96
        %v1160 = vpop.permute.xlu0 %1159
        %v1163 = vsel %vm681, %v1146, 0
        %1165 = vmatprep.subr.bf16.mxu0 0
        %1166 = vmatpush1.bf16.msra.mxu0 %v1155
        %1167 = vmatprep.subr.bf16.mxu0 0
        %1168 = vmatpush1.bf16.msra.mxu0 %v1156
        %1169 = vmatprep.subr.bf16.mxu0 0
        %1170 = vmatpush1.bf16.msra.mxu0 0
        %1171 = vmatprep.subr.bf16.mxu0 0
        %1172 = vmatpush1.bf16.msra.mxu0 0
        %1173 = vmatprep.subr.bf16.mxu0 0
        %1174 = vmatpush1.bf16.msra.mxu0 0
        %1175 = vmatprep.subr.bf16.mxu0 0
        %1176 = vmatpush1.bf16.msra.mxu0 0
        %1177 = vmatprep.subr.bf16.mxu0 0
        %1178 = vmatpush1.bf16.msra.mxu0 0
        %1179 = vmatprep.subr.bf16.mxu0 0
        %1180 = vmatpush1.bf16.msra.mxu0 0
        %1181 = vmatprep.subr.bf16.mxu0 0
        %1182 = vmatpush1.bf16.msra.mxu0 0
        %1183 = vmatprep.subr.bf16.mxu0 0
        %1184 = vmatpush1.bf16.msra.mxu0 0
        %1185 = vmatprep.subr.bf16.mxu0 0
        %1186 = vmatpush1.bf16.msra.mxu0 0
        %1187 = vmatprep.subr.bf16.mxu0 0
        %1188 = vmatpush1.bf16.msra.mxu0 0
        %1189 = vmatprep.subr.bf16.mxu0 0
        %1190 = vmatpush1.bf16.msra.mxu0 0
        %1191 = vmatprep.subr.bf16.mxu0 0
        %1192 = vmatpush1.bf16.msra.mxu0 0
        %1193 = vmatprep.subr.bf16.mxu0 0
        %1194 = vmatpush1.bf16.msra.mxu0 0
        %1195 = vmatprep.subr.bf16.mxu0 0
        %1196 = vmatpush1.bf16.msra.mxu0 0
        %1197 = vmatprep.mubr.bf16.mxu0 0
        %1198 = vmatmul.mubr.bf16.gmra.mrb[0].mxu0 %v1163
        %v1199 = vpop.f32.mrb[0].mxu0
        %v1200 = vadd.f32 %v1160, %v1199
        %v1201 = vpop.f32.mrb[0].mxu0
        %v1202 = vpop.f32.mrb[0].mxu0
        %v1203 = vpop.f32.mrb[0].mxu0
        %1204 = vdwg.mxu0
        %1206 = vrot.lane.b32.xlu0 %v1030, 96
        %v1207 = vpop.permute.xlu0 %1206
        %v1212 = vunpack.c.l.b16 %v931
        %v1213 = vunpack.c.l.b16 %v932
        %v1214 = vunpack.c.l.b16 %v933
        %v1215 = vunpack.c.l.b16 %v934
        %v1216 = vpack.c.b16 %v1213, %v1212
        %v1217 = vpack.c.b16 %v1215, %v1214
        %v1221 = vsel %vm681, %v1207, 0
        %1223 = vmatprep.subr.bf16.mxu0 0
        %1224 = vmatpush1.bf16.msra.mxu0 %v1216
        %1225 = vmatprep.subr.bf16.mxu0 0
        %1226 = vmatpush1.bf16.msra.mxu0 %v1217
        %1227 = vmatprep.subr.bf16.mxu0 0
        %1228 = vmatpush1.bf16.msra.mxu0 0
        %1229 = vmatprep.subr.bf16.mxu0 0
        %1230 = vmatpush1.bf16.msra.mxu0 0
        %1231 = vmatprep.subr.bf16.mxu0 0
        %1232 = vmatpush1.bf16.msra.mxu0 0
        %1233 = vmatprep.subr.bf16.mxu0 0
        %1234 = vmatpush1.bf16.msra.mxu0 0
        %1235 = vmatprep.subr.bf16.mxu0 0
        %1236 = vmatpush1.bf16.msra.mxu0 0
        %1237 = vmatprep.subr.bf16.mxu0 0
        %1238 = vmatpush1.bf16.msra.mxu0 0
        %1239 = vmatprep.subr.bf16.mxu0 0
        %1240 = vmatpush1.bf16.msra.mxu0 0
        %1241 = vmatprep.subr.bf16.mxu0 0
        %1242 = vmatpush1.bf16.msra.mxu0 0
        %1243 = vmatprep.subr.bf16.mxu0 0
        %1244 = vmatpush1.bf16.msra.mxu0 0
        %1245 = vmatprep.subr.bf16.mxu0 0
        %1246 = vmatpush1.bf16.msra.mxu0 0
        %1247 = vmatprep.subr.bf16.mxu0 0
        %1248 = vmatpush1.bf16.msra.mxu0 0
        %1249 = vmatprep.subr.bf16.mxu0 0
        %1250 = vmatpush1.bf16.msra.mxu0 0
        %1251 = vmatprep.subr.bf16.mxu0 0
        %1252 = vmatpush1.bf16.msra.mxu0 0
        %1253 = vmatprep.subr.bf16.mxu0 0
        %1254 = vmatpush1.bf16.msra.mxu0 0
        %1255 = vmatprep.mubr.bf16.mxu0 0
        %1256 = vmatmul.mubr.bf16.gmra.mrb[0].mxu0 %v1221
        %v1257 = vpop.f32.mrb[0].mxu0
        %v1258 = vadd.f32 0.0, %v1257
        %v1259 = vpop.f32.mrb[0].mxu0
        %v1260 = vpop.f32.mrb[0].mxu0
        %v1261 = vpop.f32.mrb[0].mxu0
        %1262 = vdwg.mxu0
        %v1263 = vadd.f32 %v1200, %v1258
        %1264 = vrot.lane.b32.xlu0 %v1088, 96
        %v1265 = vpop.permute.xlu0 %1264
        %v1270 = vunpack.c.l.b16 %v939
        %v1271 = vunpack.c.l.b16 %v940
        %v1272 = vunpack.c.l.b16 %v941
        %v1273 = vunpack.c.l.b16 %v942
        %v1274 = vpack.c.b16 %v1271, %v1270
        %v1275 = vpack.c.b16 %v1273, %v1272
        %v1279 = vsel %vm681, %v1265, 0
        %1281 = vmatprep.subr.bf16.mxu0 0
        %1282 = vmatpush1.bf16.msra.mxu0 %v1274
        %1283 = vmatprep.subr.bf16.mxu0 0
        %1284 = vmatpush1.bf16.msra.mxu0 %v1275
        %1285 = vmatprep.subr.bf16.mxu0 0
        %1286 = vmatpush1.bf16.msra.mxu0 0
        %1287 = vmatprep.subr.bf16.mxu0 0
        %1288 = vmatpush1.bf16.msra.mxu0 0
        %1289 = vmatprep.subr.bf16.mxu0 0
        %1290 = vmatpush1.bf16.msra.mxu0 0
        %1291 = vmatprep.subr.bf16.mxu0 0
        %1292 = vmatpush1.bf16.msra.mxu0 0
        %1293 = vmatprep.subr.bf16.mxu0 0
        %1294 = vmatpush1.bf16.msra.mxu0 0
        %1295 = vmatprep.subr.bf16.mxu0 0
        %1296 = vmatpush1.bf16.msra.mxu0 0
        %1297 = vmatprep.subr.bf16.mxu0 0
        %1298 = vmatpush1.bf16.msra.mxu0 0
        %1299 = vmatprep.subr.bf16.mxu0 0
        %1300 = vmatpush1.bf16.msra.mxu0 0
        %1301 = vmatprep.subr.bf16.mxu0 0
        %1302 = vmatpush1.bf16.msra.mxu0 0
        %1303 = vmatprep.subr.bf16.mxu0 0
        %1304 = vmatpush1.bf16.msra.mxu0 0
        %1305 = vmatprep.subr.bf16.mxu0 0
        %1306 = vmatpush1.bf16.msra.mxu0 0
        %1307 = vmatprep.subr.bf16.mxu0 0
        %1308 = vmatpush1.bf16.msra.mxu0 0
        %1309 = vmatprep.subr.bf16.mxu0 0
        %1310 = vmatpush1.bf16.msra.mxu0 0
        %1311 = vmatprep.subr.bf16.mxu0 0
        %1312 = vmatpush1.bf16.msra.mxu0 0
        %1313 = vmatprep.mubr.bf16.mxu0 0
        %1314 = vmatmul.mubr.bf16.gmra.mrb[0].mxu0 %v1279
        %v1315 = vpop.f32.mrb[0].mxu0
        %v1316 = vadd.f32 0.0, %v1315
        %v1317 = vpop.f32.mrb[0].mxu0
        %v1318 = vpop.f32.mrb[0].mxu0
        %v1319 = vpop.f32.mrb[0].mxu0
        %1320 = vdwg.mxu0
        %v1321 = vadd.f32 %v1263, %v1316
        %1322 = vrot.lane.b32.xlu0 %v974, 64
        %v1323 = vpop.permute.xlu0 %1322
        %v1328 = vunpack.c.l.b16 %v947
        %v1329 = vunpack.c.l.b16 %v948
        %v1330 = vunpack.c.l.b16 %v949
        %v1331 = vunpack.c.l.b16 %v950
        %v1332 = vpack.c.b16 %v1329, %v1328
        %v1333 = vpack.c.b16 %v1331, %v1330
        %1336 = vrot.lane.b32.xlu0 %v966, 64
        %v1337 = vpop.permute.xlu0 %1336
        %v1340 = vsel %vm681, %v1323, 0
        %1342 = vmatprep.subr.bf16.mxu0 0
        %1343 = vmatpush1.bf16.msra.mxu0 %v1332
        %1344 = vmatprep.subr.bf16.mxu0 0
        %1345 = vmatpush1.bf16.msra.mxu0 %v1333
        %1346 = vmatprep.subr.bf16.mxu0 0
        %1347 = vmatpush1.bf16.msra.mxu0 0
        %1348 = vmatprep.subr.bf16.mxu0 0
        %1349 = vmatpush1.bf16.msra.mxu0 0
        %1350 = vmatprep.subr.bf16.mxu0 0
        %1351 = vmatpush1.bf16.msra.mxu0 0
        %1352 = vmatprep.subr.bf16.mxu0 0
        %1353 = vmatpush1.bf16.msra.mxu0 0
        %1354 = vmatprep.subr.bf16.mxu0 0
        %1355 = vmatpush1.bf16.msra.mxu0 0
        %1356 = vmatprep.subr.bf16.mxu0 0
        %1357 = vmatpush1.bf16.msra.mxu0 0
        %1358 = vmatprep.subr.bf16.mxu0 0
        %1359 = vmatpush1.bf16.msra.mxu0 0
        %1360 = vmatprep.subr.bf16.mxu0 0
        %1361 = vmatpush1.bf16.msra.mxu0 0
        %1362 = vmatprep.subr.bf16.mxu0 0
        %1363 = vmatpush1.bf16.msra.mxu0 0
        %1364 = vmatprep.subr.bf16.mxu0 0
        %1365 = vmatpush1.bf16.msra.mxu0 0
        %1366 = vmatprep.subr.bf16.mxu0 0
        %1367 = vmatpush1.bf16.msra.mxu0 0
        %1368 = vmatprep.subr.bf16.mxu0 0
        %1369 = vmatpush1.bf16.msra.mxu0 0
        %1370 = vmatprep.subr.bf16.mxu0 0
        %1371 = vmatpush1.bf16.msra.mxu0 0
        %1372 = vmatprep.subr.bf16.mxu0 0
        %1373 = vmatpush1.bf16.msra.mxu0 0
        %1374 = vmatprep.mubr.bf16.mxu0 0
        %1375 = vmatmul.mubr.bf16.gmra.mrb[0].mxu0 %v1340
        %v1376 = vpop.f32.mrb[0].mxu0
        %v1377 = vadd.f32 %v1337, %v1376
        %v1378 = vpop.f32.mrb[0].mxu0
        %v1379 = vpop.f32.mrb[0].mxu0
        %v1380 = vpop.f32.mrb[0].mxu0
        %1381 = vdwg.mxu0
        %1382 = vrot.lane.b32.xlu0 %v1030, 64
        %v1383 = vpop.permute.xlu0 %1382
        %v1388 = vunpack.c.l.b16 %v943
        %v1389 = vunpack.c.l.b16 %v944
        %v1390 = vunpack.c.l.b16 %v945
        %v1391 = vunpack.c.l.b16 %v946
        %v1392 = vpack.c.b16 %v1389, %v1388
        %v1393 = vpack.c.b16 %v1391, %v1390
        %v1397 = vsel %vm681, %v1383, 0
        %1399 = vmatprep.subr.bf16.mxu0 0
        %1400 = vmatpush1.bf16.msra.mxu0 %v1392
        %1401 = vmatprep.subr.bf16.mxu0 0
        %1402 = vmatpush1.bf16.msra.mxu0 %v1393
        %1403 = vmatprep.subr.bf16.mxu0 0
        %1404 = vmatpush1.bf16.msra.mxu0 0
        %1405 = vmatprep.subr.bf16.mxu0 0
        %1406 = vmatpush1.bf16.msra.mxu0 0
        %1407 = vmatprep.subr.bf16.mxu0 0
        %1408 = vmatpush1.bf16.msra.mxu0 0
        %1409 = vmatprep.subr.bf16.mxu0 0
        %1410 = vmatpush1.bf16.msra.mxu0 0
        %1411 = vmatprep.subr.bf16.mxu0 0
        %1412 = vmatpush1.bf16.msra.mxu0 0
        %1413 = vmatprep.subr.bf16.mxu0 0
        %1414 = vmatpush1.bf16.msra.mxu0 0
        %1415 = vmatprep.subr.bf16.mxu0 0
        %1416 = vmatpush1.bf16.msra.mxu0 0
        %1417 = vmatprep.subr.bf16.mxu0 0
        %1418 = vmatpush1.bf16.msra.mxu0 0
        %1419 = vmatprep.subr.bf16.mxu0 0
        %1420 = vmatpush1.bf16.msra.mxu0 0
        %1421 = vmatprep.subr.bf16.mxu0 0
        %1422 = vmatpush1.bf16.msra.mxu0 0
        %1423 = vmatprep.subr.bf16.mxu0 0
        %1424 = vmatpush1.bf16.msra.mxu0 0
        %1425 = vmatprep.subr.bf16.mxu0 0
        %1426 = vmatpush1.bf16.msra.mxu0 0
        %1427 = vmatprep.subr.bf16.mxu0 0
        %1428 = vmatpush1.bf16.msra.mxu0 0
        %1429 = vmatprep.subr.bf16.mxu0 0
        %1430 = vmatpush1.bf16.msra.mxu0 0
        %1431 = vmatprep.mubr.bf16.mxu0 0
        %1432 = vmatmul.mubr.bf16.gmra.mrb[0].mxu0 %v1397
        %v1433 = vpop.f32.mrb[0].mxu0
        %v1434 = vadd.f32 0.0, %v1433
        %v1435 = vpop.f32.mrb[0].mxu0
        %v1436 = vpop.f32.mrb[0].mxu0
        %v1437 = vpop.f32.mrb[0].mxu0
        %1438 = vdwg.mxu0
        %v1439 = vadd.f32 %v1377, %v1434
        %1440 = vrot.lane.b32.xlu0 %v1088, 64
        %v1441 = vpop.permute.xlu0 %1440
        %v1446 = vunpack.c.l.b16 %v951
        %v1447 = vunpack.c.l.b16 %v952
        %v1448 = vunpack.c.l.b16 %v953
        %v1449 = vunpack.c.l.b16 %v954
        %v1450 = vpack.c.b16 %v1447, %v1446
        %v1451 = vpack.c.b16 %v1449, %v1448
        %v1455 = vsel %vm681, %v1441, 0
        %1457 = vmatprep.subr.bf16.mxu0 0
        %1458 = vmatpush1.bf16.msra.mxu0 %v1450
        %1459 = vmatprep.subr.bf16.mxu0 0
        %1460 = vmatpush1.bf16.msra.mxu0 %v1451
        %1461 = vmatprep.subr.bf16.mxu0 0
        %1462 = vmatpush1.bf16.msra.mxu0 0
        %1463 = vmatprep.subr.bf16.mxu0 0
        %1464 = vmatpush1.bf16.msra.mxu0 0
        %1465 = vmatprep.subr.bf16.mxu0 0
        %1466 = vmatpush1.bf16.msra.mxu0 0
        %1467 = vmatprep.subr.bf16.mxu0 0
        %1468 = vmatpush1.bf16.msra.mxu0 0
        %1469 = vmatprep.subr.bf16.mxu0 0
        %1470 = vmatpush1.bf16.msra.mxu0 0
        %1471 = vmatprep.subr.bf16.mxu0 0
        %1472 = vmatpush1.bf16.msra.mxu0 0
        %1473 = vmatprep.subr.bf16.mxu0 0
        %1474 = vmatpush1.bf16.msra.mxu0 0
        %1475 = vmatprep.subr.bf16.mxu0 0
        %1476 = vmatpush1.bf16.msra.mxu0 0
        %1477 = vmatprep.subr.bf16.mxu0 0
        %1478 = vmatpush1.bf16.msra.mxu0 0
        %1479 = vmatprep.subr.bf16.mxu0 0
        %1480 = vmatpush1.bf16.msra.mxu0 0
        %1481 = vmatprep.subr.bf16.mxu0 0
        %1482 = vmatpush1.bf16.msra.mxu0 0
        %1483 = vmatprep.subr.bf16.mxu0 0
        %1484 = vmatpush1.bf16.msra.mxu0 0
        %1485 = vmatprep.subr.bf16.mxu0 0
        %1486 = vmatpush1.bf16.msra.mxu0 0
        %1487 = vmatprep.subr.bf16.mxu0 0
        %1488 = vmatpush1.bf16.msra.mxu0 0
        %1489 = vmatprep.mubr.bf16.mxu0 0
        %1490 = vmatmul.mubr.bf16.gmra.mrb[0].mxu0 %v1455
        %v1491 = vpop.f32.mrb[0].mxu0
        %v1492 = vadd.f32 0.0, %v1491
        %v1493 = vpop.f32.mrb[0].mxu0
        %v1494 = vpop.f32.mrb[0].mxu0
        %v1495 = vpop.f32.mrb[0].mxu0
        %1496 = vdwg.mxu0
        %v1497 = vadd.f32 %v1439, %v1492
        %1499 = vrot.lane.b32.xlu0 %v1321, 32
        %v1500 = vpop.permute.xlu0 %1499
        %1503 = vrot.lane.b32.xlu0 %v1497, 64
        %v1504 = vpop.permute.xlu0 %1503
        %v1506 = vsel %vm681, %v1144, %v1500
        %v1507 = vsel %vm902, %v1506, %v1504
        %v1508 = vmax.f32 %v1507, 0.0
        %v1509 = vld [vmem:[%s10] sm:$0x1]
        %v1510 = vld [vmem:[%s11] sm:$0x1]
        %v1511 = vsel %vm681, %v1508, 0.0
        %1512 = vadd.xlane.f32.xlu0 %v1511
        %v1513 = vpop.xlane.xlu0 %1512
        %v1514 = vmul.f32 %v1513, %v846
        %v1515 = vmul.f32 %v1508, %v1508
        %v1516 = vsel %vm681, %v1515, 0.0
        %1517 = vadd.xlane.f32.xlu0 %v1516
        %v1518 = vpop.xlane.xlu0 %1517
        %v1519 = vmul.f32 %v1518, %v846
        %v1520 = vmul.f32 %v1514, %v1514
        %v1521 = vsub.f32 %v1519, %v1520
        %v1522 = vsub.f32 %v1508, %v1514
        %v1523 = vadd.f32 %v1521, 1e-05
        %v1524 = vrsqrt.pop %v1523
        %v1525 = vmul.f32 %v1522, %v1524
        %1527 = vrot.lane.b32.xlu0 %v1508, 96
        %v1528 = vpop.permute.xlu0 %1527
        %v1530 = vsel %vm681, %v1528, 0.0
        %1531 = vadd.xlane.f32.xlu0 %v1530
        %v1532 = vpop.xlane.xlu0 %1531
        %v1533 = vmul.f32 %v1532, %v846
        %1535 = vrot.lane.b32.xlu0 %v1515, 96
        %v1536 = vpop.permute.xlu0 %1535
        %v1538 = vsel %vm681, %v1536, 0.0
        %1539 = vadd.xlane.f32.xlu0 %v1538
        %v1540 = vpop.xlane.xlu0 %1539
        %v1541 = vmul.f32 %v1540, %v846
        %v1542 = vmul.f32 %v1533, %v1533
        %v1543 = vsub.f32 %v1541, %v1542
        %v1544 = vsub.f32 %v1508, %v1533
        %v1545 = vadd.f32 %v1543, 1e-05
        %v1546 = vrsqrt.pop %v1545
        %v1547 = vmul.f32 %v1544, %v1546
        %1548 = vrot.lane.b32.xlu0 %v1508, 64
        %v1549 = vpop.permute.xlu0 %1548
        %v1551 = vsel %vm681, %v1549, 0.0
        %1552 = vadd.xlane.f32.xlu0 %v1551
        %v1553 = vpop.xlane.xlu0 %1552
        %v1554 = vmul.f32 %v1553, %v846
        %1555 = vrot.lane.b32.xlu0 %v1515, 64
        %v1556 = vpop.permute.xlu0 %1555
        %v1558 = vsel %vm681, %v1556, 0.0
        %1559 = vadd.xlane.f32.xlu0 %v1558
        %v1560 = vpop.xlane.xlu0 %1559
        %v1561 = vmul.f32 %v1560, %v846
        %v1562 = vmul.f32 %v1554, %v1554
        %v1563 = vsub.f32 %v1561, %v1562
        %v1564 = vsub.f32 %v1508, %v1554
        %v1565 = vadd.f32 %v1563, 1e-05
        %v1566 = vrsqrt.pop %v1565
        %v1567 = vmul.f32 %v1564, %v1566
        %v1568 = vsel %vm681, %v1525, %v1547
        %v1569 = vsel %vm902, %v1568, %v1567
        %v1571 = vlaneseq
        %v1572 = vshrl.u32 %v1571, 7
        %v1573 = vsub.s32 0, %v1572
        %v1574 = vrot.slane %v1509, %v1573
        %v1576 = vmul.f32 %v1569, %v1574
        %v1578 = vlaneseq
        %v1579 = vshrl.u32 %v1578, 7
        %v1580 = vsub.s32 0, %v1579
        %v1581 = vrot.slane %v1510, %v1580
        %v1583 = vadd.f32 %v1576, %v1581
        %v1584 = vld [vmem:[%s12] sm:$0x1]
        %v1586 = vlaneseq
        %v1587 = vshrl.u32 %v1586, 7
        %v1588 = vsub.s32 0, %v1587
        %v1589 = vrot.slane %v1584, %v1588
        %v1591 = vmul.f32 %v1583, %v1589
        %v1592 = vsel %vm681, %v1591, 0.0
        %1593 = vadd.xlane.f32.xlu0 %v1592
        %v1594 = vpop.xlane.xlu0 %1593
        %s1595 = sld [smem:[#allocation7]]
        %v1596 = vstv %s1595
        %v1597 = vadd.f32 %v1594, %v1596
        %v1598 = vmul.f32 %v1597, %v629
        %1600 = vrot.lane.b32.xlu0 %v1591, 96
        %v1601 = vpop.permute.xlu0 %1600
        %v1603 = vsel %vm681, %v1601, 0.0
        %1604 = vadd.xlane.f32.xlu0 %v1603
        %v1605 = vpop.xlane.xlu0 %1604
        %s1606 = sld [smem:[#allocation7 + $0x1]]
        %v1607 = vstv %s1606
        %v1608 = vadd.f32 %v1605, %v1607
        %v1609 = vmul.f32 %v1608, %v629
        %s1610 = sld [smem:[#allocation2]]
        %v1611 = vstv %s1610
        %v1612 = vmul.f32 %v1609, %v1611
        %1613 = vrot.lane.b32.xlu0 %v1591, 64
        %v1614 = vpop.permute.xlu0 %1613
        %v1616 = vsel %vm681, %v1614, 0.0
        %1617 = vadd.xlane.f32.xlu0 %v1616
        %v1618 = vpop.xlane.xlu0 %1617
        %s1619 = sld [smem:[#allocation7 + $0x2]]
        %v1620 = vstv %s1619
        %v1621 = vadd.f32 %v1618, %v1620
        %v1622 = vmul.f32 %v1621, %v629
        %s1623 = sld [smem:[#allocation2 + $0x1]]
        %v1624 = vstv %s1623
        %v1625 = vmul.f32 %v1622, %v1624
        %v1626 = vmul.f32 %v1598, 1.442695
        %v1627 = vpow.pop %v1626
        %v1628 = vsub.f32 %v1627, 1.0
        %v1629 = vround.ne.pseudo %v1628
        %v1630 = vmax.f32 %v1629, 0.0
        %s1631 = sld [smem:[#allocation2 + $0x2]]
        %v1632 = vstv %s1631
        %v1633 = vmul.f32 %v1630, %v1632
        %v1634 = vld [vmem:[%s13] sm:$0x1]
        %v1635 = vld [vmem:[%s14] sm:$0x1]
        %1637 = vset.pattern.permute.xlu0 0
        %1638 = vperm.xlu0 %1637, %v1612
        %v1639 = vpop.permute.xlu0 %1638
        %v1642 = vlaneseq
        %v1643 = vshrl.u32 %v1642, 7
        %v1644 = vsub.s32 0, %v1643
        %v1645 = vrot.slane %v1634, %v1644
        %vm1647 = vcmp.gt.f32.partialorder %v1639, %v1645
        %v1648 = vsel %vm1647, 1, 0
        %vm1649 = vcmask 56320
        %v1650 = vsel %vm1649, %v1648, 0
        %v1651 = vand.u32 %v1650, 65535
        %v1652 = vshrl.u32 %v1650, 16
        %v1653 = vcvt.s32.f32 %v1651
        %v1654 = vcvt.s32.f32 %v1652
        %1655 = vadd.xlane.f32.xlu0 %v1653
        %v1656 = vpop.xlane.xlu0 %1655
        %1657 = vadd.xlane.f32.xlu0 %v1654
        %v1658 = vpop.xlane.xlu0 %1657
        %v1659 = vcvt.f32.s32 %v1656
        %v1660 = vcvt.f32.s32 %v1658
        %v1661 = vshll.u32 %v1660, 16
        %v1662 = vadd.s32 %v1661, %v1659
        %1664 = vset.pattern.permute.xlu0 0
        %1665 = vperm.xlu0 %1664, %v1625
        %v1666 = vpop.permute.xlu0 %1665
        %v1669 = vlaneseq
        %v1670 = vshrl.u32 %v1669, 7
        %v1671 = vsub.s32 0, %v1670
        %v1672 = vrot.slane %v1635, %v1671
        %vm1674 = vcmp.gt.f32.partialorder %v1666, %v1672
        %v1675 = vsel %vm1674, 1, 0
        %v1676 = vsel %vm1649, %v1675, 0
        %v1677 = vand.u32 %v1676, 65535
        %v1678 = vshrl.u32 %v1676, 16
        %v1679 = vcvt.s32.f32 %v1677
        %v1680 = vcvt.s32.f32 %v1678
        %1681 = vadd.xlane.f32.xlu0 %v1679
        %v1682 = vpop.xlane.xlu0 %1681
        %1683 = vadd.xlane.f32.xlu0 %v1680
        %v1684 = vpop.xlane.xlu0 %1683
        %v1685 = vcvt.f32.s32 %v1682
        %v1686 = vcvt.f32.s32 %v1684
        %v1687 = vshll.u32 %v1686, 16
        %v1688 = vadd.s32 %v1687, %v1685
        %v1689 = vlaneseq
        %v1690 = vand.u32 %v1689, 127
        %vm1691 = vcmp.eq.s32.totalorder %v1690, %v1662
        %v1692 = vadd.s32 %v1688, 8
        %vm1693 = vcmp.eq.s32.totalorder %v1690, %v1692
        %vm1694 = vmor %vm1691, %vm1693
        %v1695 = vsel %vm1694, 1, 0
        %v1696 = vcvt.s32.f32 %v1695
        %v1697 = vld [vmem:[%s15] sm:$0xff]
        %v1698 = vld [vmem:[%s15 + $0x8] sm:$0xff]
        %vm1699 = vcmask 130048
        %v1701 = vsel %vm1699, %v1696, 0
        %1703 = vmatprep.subr.mxu0 0.0
        %1704 = vmatpush1.msra.mxu0 %v1697
        %1705 = vmatprep.subr.mxu0 0.0
        %1706 = vmatpush1.msra.mxu0 %v1698
        %1707 = vmatprep.subr.mxu0 0.0
        %1708 = vmatpush1.msra.mxu0 0.0
        %1709 = vmatprep.subr.mxu0 0.0
        %1710 = vmatpush1.msra.mxu0 0.0
        %1711 = vmatprep.subr.mxu0 0.0
        %1712 = vmatpush1.msra.mxu0 0.0
        %1713 = vmatprep.subr.mxu0 0.0
        %1714 = vmatpush1.msra.mxu0 0.0
        %1715 = vmatprep.subr.mxu0 0.0
        %1716 = vmatpush1.msra.mxu0 0.0
        %1717 = vmatprep.subr.mxu0 0.0
        %1718 = vmatpush1.msra.mxu0 0.0
        %1719 = vmatprep.subr.mxu0 0.0
        %1720 = vmatpush1.msra.mxu0 0.0
        %1721 = vmatprep.subr.mxu0 0.0
        %1722 = vmatpush1.msra.mxu0 0.0
        %1723 = vmatprep.subr.mxu0 0.0
        %1724 = vmatpush1.msra.mxu0 0.0
        %1725 = vmatprep.subr.mxu0 0.0
        %1726 = vmatpush1.msra.mxu0 0.0
        %1727 = vmatprep.subr.mxu0 0.0
        %1728 = vmatpush1.msra.mxu0 0.0
        %1729 = vmatprep.subr.mxu0 0.0
        %1730 = vmatpush1.msra.mxu0 0.0
        %1731 = vmatprep.subr.mxu0 0.0
        %1732 = vmatpush1.msra.mxu0 0.0
        %1733 = vmatprep.subr.mxu0 0.0
        %1734 = vmatpush1.msra.mxu0 0.0
        %1735 = vmatprep.subr.mxu0 0.0
        %1736 = vmatpush1.msra.mxu0 0.0
        %1737 = vmatprep.subr.mxu0 0.0
        %1738 = vmatpush1.msra.mxu0 0.0
        %1739 = vmatprep.subr.mxu0 0.0
        %1740 = vmatpush1.msra.mxu0 0.0
        %1741 = vmatprep.subr.mxu0 0.0
        %1742 = vmatpush1.msra.mxu0 0.0
        %1743 = vmatprep.subr.mxu0 0.0
        %1744 = vmatpush1.msra.mxu0 0.0
        %1745 = vmatprep.subr.mxu0 0.0
        %1746 = vmatpush1.msra.mxu0 0.0
        %1747 = vmatprep.subr.mxu0 0.0
        %1748 = vmatpush1.msra.mxu0 0.0
        %1749 = vmatprep.subr.mxu0 0.0
        %1750 = vmatpush1.msra.mxu0 0.0
        %1751 = vmatprep.subr.mxu0 0.0
        %1752 = vmatpush1.msra.mxu0 0.0
        %1753 = vmatprep.subr.mxu0 0.0
        %1754 = vmatpush1.msra.mxu0 0.0
        %1755 = vmatprep.subr.mxu0 0.0
        %1756 = vmatpush1.msra.mxu0 0.0
        %1757 = vmatprep.subr.mxu0 0.0
        %1758 = vmatpush1.msra.mxu0 0.0
        %1759 = vmatprep.subr.mxu0 0.0
        %1760 = vmatpush1.msra.mxu0 0.0
        %1761 = vmatprep.subr.mxu0 0.0
        %1762 = vmatpush1.msra.mxu0 0.0
        %1763 = vmatprep.subr.mxu0 0.0
        %1764 = vmatpush1.msra.mxu0 0.0
        %1765 = vmatprep.subr.mxu0 0.0
        %1766 = vmatpush1.msra.mxu0 0.0
        %1767 = vmatprep.mubr.f32.mxu0 0.0
        %1768 = vmatmul.mubr.f32.gmra.mrb[0].mxu0 %v1701
        %v1769 = vpop.f32.mrb[0].mxu0
        %v1770 = vadd.f32 0.0, %v1769
        %v1771 = vpop.f32.mrb[0].mxu0
        %1772 = vdwg.mxu0
        %v1773 = vadd.f32 %v628, %v1770
        %1774 = vst.msk [vmem:[%s611] sm:$0xff] %vm681, %v1773
        %1776 = vset.pattern.permute.xlu0 0
        %1777 = vperm.xlu0 %1776, %v1598
        %v1778 = vpop.permute.xlu0 %1777
        %v1779 = vlaneseq
        %v1780 = vshrl.u32 %v1779, 7
        %v1781 = vsub.s32 %v1690, %v1780
        %v1782 = vrot.slane %v1778, %v1781
        %v1784 = vlaneseq
        %v1785 = vshrl.u32 %v1784, 7
        %v1786 = vsub.s32 %v1690, %v1785
        %v1787 = vrot.slane %v1639, %v1786
        %v1789 = vlaneseq
        %v1790 = vshrl.u32 %v1789, 7
        %v1791 = vsub.s32 %v1690, %v1790
        %v1792 = vrot.slane %v1666, %v1791
        %1795 = vset.pattern.permute.xlu0 0
        %1796 = vperm.xlu0 %1795, %v1633
        %v1797 = vpop.permute.xlu0 %1796
        %v1798 = vlaneseq
        %v1799 = vshrl.u32 %v1798, 7
        %v1800 = vsub.s32 %v1690, %v1799
        %v1801 = vrot.slane %v1797, %v1800
        %v1803 = vsel %vm652, %v1782, %v1787
        %vm1804 = vcmask 1041408
        %v1805 = vsel %vm1804, %v1803, %v1792
        %vm1806 = vcmask 1042432
        %v1807 = vsel %vm1806, %v1805, %v1801
        %vm1808 = vcmask 60416
        %1809 = vst.msk [vmem:[%s618] sm:$0xf] %vm1808, %v1807
        %s1810 = sand.u32 %s393, 1
        %s1811 = scalar_lea.sflag [#allocation4], %s1810
        %s1812 = sand.u32 %s393, 1
        %s1813 = smul.addr %s1812, 8
        %s1814 = scalar_lea.vmem [#allocation11], %s1813
        %s1815 = sand.u32 %s419, 1
        %s1816 = scalar_lea.sflag [#allocation13], %s1815
        %s1817 = sand.u32 %s419, 1
        %s1818 = smul.addr %s1817, 4
        %s1819 = scalar_lea.vmem [#allocation12], %s1818
        // Predicated region
        $region101: #{tpu_custom_call.1} parent=83 // pred_check
          %p1820 = pneg %p403
        $region102: #{tpu_custom_call.1} parent=83 // pred_check_branch
          %1822 = sbr.rel (%p1820) target = $region104
        $region103: #{tpu_custom_call.1} parent=83 // pred_region
          %s1824 = ssub.s32 128, 128
          %1825 = vsyncadd %s1811, %s1824
          %s1826 = smul.addr %s39, 128
          %s1827 = scalar_lea.hbm %s16, %s1826
          %s1829 = sshll.u32 %s1814, 4
          %s1830 = int_to_ptr.vmem [resolvable:$true] %s1829
          %1832 = dma.vmem_to_hbm [thread:$0]  %s1830, 128, %s1827, %s1811
        $region104: #{tpu_custom_call.1} parent=83 // pred_fallthru
          _
        // Predicated region
        $region105: #{tpu_custom_call.1} parent=83 // pred_check
          %p1833 = pneg %p429
        $region106: #{tpu_custom_call.1} parent=83 // pred_check_branch
          %1835 = sbr.rel (%p1833) target = $region108
        $region107: #{tpu_custom_call.1} parent=83 // pred_region
          %s1837 = ssub.s32 64, 64
          %1838 = vsyncadd %s1816, %s1837
          %s1839 = smul.addr %s39, 64
          %s1840 = scalar_lea.hbm %s17, %s1839
          %s1842 = sshll.u32 %s1819, 4
          %s1843 = int_to_ptr.vmem [resolvable:$true] %s1842
          %1845 = dma.vmem_to_hbm [thread:$0]  %s1843, 64, %s1840, %s1816
        $region108: #{tpu_custom_call.1} parent=83 // pred_fallthru
          _
      $region84: #{tpu_custom_call.1} parent=5 // pred_fallthru
        _
      %p1846 = scmp.le.s32.totalorder 2, %s34
      // Predicated region
      $region109: #{tpu_custom_call.1} parent=5 // pred_check
        %p1847 = pneg %p1846
      $region110: #{tpu_custom_call.1} parent=5 // pred_check_branch
        %1849 = sbr.rel (%p1847) target = $region112
      $region111: #{tpu_custom_call.1} parent=5 // pred_region
        %s1850 = ssub.s32 %s34, 2
        // Predicated region
        $region113: #{tpu_custom_call.1} parent=111 // pred_check
          %p1851 = pneg %p409
        $region114: #{tpu_custom_call.1} parent=111 // pred_check_branch
          %1853 = sbr.rel (%p1851) target = $region116
        $region115: #{tpu_custom_call.1} parent=111 // pred_region
          %s1854 = sand.u32 %s394, 1
          %s1855 = scalar_lea.sflag [#allocation4], %s1854
          %s1856 = sand.u32 %s394, 1
          %s1857 = smul.addr %s1856, 8
          %s1858 = scalar_lea.vmem [#allocation11], %s1857
          %1859 = dma.done %s1855, 128
        $region116: #{tpu_custom_call.1} parent=111 // pred_fallthru
          _
        // Predicated region
        $region117: #{tpu_custom_call.1} parent=111 // pred_check
          %p1860 = pneg %p435
        $region118: #{tpu_custom_call.1} parent=111 // pred_check_branch
          %1862 = sbr.rel (%p1860) target = $region120
        $region119: #{tpu_custom_call.1} parent=111 // pred_region
          %s1863 = sand.u32 %s420, 1
          %s1864 = scalar_lea.sflag [#allocation13], %s1863
          %s1865 = sand.u32 %s420, 1
          %s1866 = smul.addr %s1865, 4
          %s1867 = scalar_lea.vmem [#allocation12], %s1866
          %1868 = dma.done %s1864, 64
        $region120: #{tpu_custom_call.1} parent=111 // pred_fallthru
          _
      $region112: #{tpu_custom_call.1} parent=5 // pred_fallthru
        _
    $region6: #{tpu_custom_call.1} parent=1 // loop_footer
      %s38 = sadd.s32 1, %s34
    $region7: #{tpu_custom_call.1} parent=1 // loop_footer_branch
      %33 = sbr.rel target = $region3
    $region8: #{tpu_custom_call.1} parent=1 // loop_exit
      _
    %1869 = vsyncpa [#allocation3], 1
    %s1870 = scalar_lea.sflag [#allocation3], 1
    %1871 = vsyncpa %s1870, 1
    %1872 = vsyncpa [#allocation10], 1
    %1873 = vsyncpa [#allocation4], 1
    %s1874 = scalar_lea.sflag [#allocation4], 1
    %1875 = vsyncpa %s1874, 1
    %1876 = vsyncpa [#allocation13], 1
    %s1877 = scalar_lea.sflag [#allocation13], 1
    %1878 = vsyncpa %s1877, 1
    %1879 = vsyncpa [#allocation5], 1
    %s1880 = scalar_lea.sflag [#allocation5], 1
    %1881 = vsyncpa %s1880, 1
    %1882 = vsyncpa [#allocation6], 1
    %s1883 = scalar_lea.sflag [#allocation6], 1
    %1884 = vsyncpa %s1883, 1

</llo_original>
